<compile_context>
chip_gen: v7x
topology: tpu7x:2x2x1
jax: 0.10.0
libtpu: 0.0.40
codegen_flags: <defaults>
</compile_context>

<pallas_src>
import functools

import jax
import jax.numpy as jnp
from jax.experimental import pallas as pl
from jax.experimental.pallas import tpu as pltpu

_NEG = -1e30  # fills padded class lanes: drops out of max / logsumexp
_VMEM_BUDGET = 32 << 20  # keep comfortably under v7x's 64 MiB physical VMEM


def _round_up(n, m):
    return ((n + m - 1) // m) * m


def _pad2(a, rows, cols):
    return jnp.pad(a, ((0, rows - a.shape[0]), (0, cols - a.shape[1])))


def _largest_divisor_tile(n, cap, step=256):
    """Largest multiple of `step` that divides n and is <= cap."""
    best = step
    t = step
    while t <= min(cap, n):
        if n % t == 0:
            best = t
        t += step
    return best


def _dma_eff(t):
    # Measured fraction of HBM roofline vs square-ish tile edge (v6e numbers).
    if t >= 1024:
        return 0.86
    if t >= 512:
        return 0.85
    if t >= 256:
        return 0.63
    return 0.30


def _vmem_estimate(tm, tk, n_pad, f_pad, c_pad, x_resident):
    adj = 2 * tm * tk * 2                                   # bf16, double-buffered
    x = (2 * n_pad * f_pad * 2) if x_resident else (2 * tk * f_pad * 2)
    acc = tm * f_pad * 4                                    # f32 accumulator scratch
    hop1 = 2 * tm * f_pad * 2                               # bf16 h tile out
    hop2 = 2 * tm * c_pad * 4 + 2 * f_pad * c_pad * 2 + 2 * c_pad * 4
    return adj + x + acc + max(hop1, hop2)


def _choose_config(N, F, C):
    """Pick padding, tiles, residency mode and a VMEM limit from the shapes."""
    f_pad = _round_up(F, 128)
    c_pad = _round_up(C, 128)

    best = None
    for align in (256, 512, 1024, 2048):
        n_pad = _round_up(N, align)
        # x/h resident (double-buffered by BlockSpec) when it stays <= 16 MiB.
        x_res = (n_pad * f_pad * 2) <= (8 << 20)
        tm = tk = 256
        for tm_cap, tk_cap in ((1024, 2048), (1024, 1024), (512, 1024),
                               (512, 512), (256, 256)):
            tm = _largest_divisor_tile(n_pad, tm_cap)
            tk = _largest_divisor_tile(n_pad, tk_cap)
            if _vmem_estimate(tm, tk, n_pad, f_pad, c_pad, x_res) <= _VMEM_BUDGET:
                break
        # Keep the "parallel" row axis >= 2 tiles so v7x megacore can split it.
        if n_pad // tm == 1 and tm % 512 == 0:
            tm //= 2
        # Score ~ adj HBM bytes streamed / achieved DMA efficiency (lower = better).
        score = (n_pad * n_pad) / _dma_eff(min(tm, tk))
        if best is None or score < best[0]:
            best = (score, n_pad, tm, tk, x_res)

    _, n_pad, tm, tk, x_res = best
    est = _vmem_estimate(tm, tk, n_pad, f_pad, c_pad, x_res)
    vmem_limit = int(min(100 << 20, max(24 << 20, est + (8 << 20))))
    return n_pad, f_pad, c_pad, tm, tk, x_res, vmem_limit


# --------------------------------------------------------------------------
# Pass 1: h = adj @ x   (row-tiled, K-accumulated propagation, bf16 in/out)
# --------------------------------------------------------------------------
def _propagate_kernel(adj_ref, x_ref, out_ref, acc_ref, *, tk, x_resident):
    k = pl.program_id(1)

    @pl.when(k == 0)
    def _():
        acc_ref[...] = jnp.zeros_like(acc_ref)

    if x_resident:
        # x is VMEM-resident (fetched once); slice the K-block in-kernel.
        x_blk = x_ref[pl.ds(pl.multiple_of(k * tk, tk), tk), :]
    else:
        x_blk = x_ref[...]
    acc_ref[...] += jnp.dot(adj_ref[...], x_blk,
                            preferred_element_type=jnp.float32)

    @pl.when(k == pl.num_programs(1) - 1)
    def _():
        out_ref[...] = acc_ref[...].astype(out_ref.dtype)


# --------------------------------------------------------------------------
# Pass 2: h2 = adj @ h ; logits = h2 @ W + b ; out = log_softmax(logits)
# Classifier + log_softmax fused into the last-K epilogue; lane-dense output.
# --------------------------------------------------------------------------
def _propagate_classify_kernel(adj_ref, h_ref, w_ref, b_ref, out_ref, acc_ref,
                               *, tk, x_resident):
    k = pl.program_id(1)

    @pl.when(k == 0)
    def _():
        acc_ref[...] = jnp.zeros_like(acc_ref)

    if x_resident:
        h_blk = h_ref[pl.ds(pl.multiple_of(k * tk, tk), tk), :]
    else:
        h_blk = h_ref[...]
    acc_ref[...] += jnp.dot(adj_ref[...], h_blk,
                            preferred_element_type=jnp.float32)

    @pl.when(k == pl.num_programs(1) - 1)
    def _():
        # [tm, F_pad](bf16) @ [F_pad, C_pad](bf16) -> f32, + f32 bias.  Padded
        # class lanes get a -1e30 bias (W pad columns are exactly zero) so
        # they vanish from max / logsumexp.
        logits = jnp.dot(acc_ref[...].astype(jnp.bfloat16), w_ref[...],
                         preferred_element_type=jnp.float32) + b_ref[...]
        m = jnp.max(logits, axis=1, keepdims=True)
        z = logits - m
        lse = jnp.log(jnp.sum(jnp.exp(z), axis=1, keepdims=True))
        out_ref[...] = z - lse


def lightgcn_forward(x, adj, w, b):
    """x:[N,F] f32, adj:[N,N] f32, w:[F,C] f32 (pre-transposed Linear), b:[1,C] f32."""
    N, F = x.shape
    C = w.shape[1]
    N_pad, F_pad, C_pad, tm, tk, x_res, vmem_limit = _choose_config(N, F, C)

    # ---- operand prep (fuses under jit; cache these for a fixed graph) ------
    adj_p = _pad2(jnp.asarray(adj, jnp.float32), N_pad, N_pad).astype(jnp.bfloat16)
    x_p = _pad2(jnp.asarray(x, jnp.float32), N_pad, F_pad).astype(jnp.bfloat16)
    w_p = _pad2(jnp.asarray(w, jnp.float32), F_pad, C_pad).astype(jnp.bfloat16)
    b_p = jnp.full((1, C_pad), _NEG, dtype=jnp.float32)
    b_p = b_p.at[:, :C].set(jnp.asarray(b, jnp.float32).reshape(1, C))

    grid = (N_pad // tm, N_pad // tk)
    cparams = pltpu.CompilerParams(
        dimension_semantics=("parallel", "arbitrary"),
        vmem_limit_bytes=vmem_limit,
    )

    adj_spec = pl.BlockSpec((tm, tk), lambda i, k: (i, k))
    if x_res:
        # Constant-index full-extent block: DMA'd once, never re-streamed.
        feat_spec = pl.BlockSpec((N_pad, F_pad), lambda i, k: (0, 0))
    else:
        feat_spec = pl.BlockSpec((tk, F_pad), lambda i, k: (k, 0))

    ce1 = pl.CostEstimate(
        flops=2 * N_pad * N_pad * F_pad,
        transcendentals=0,
        bytes_accessed=N_pad * N_pad * 2 + 2 * N_pad * F_pad * 2,
    )
    ce2 = pl.CostEstimate(
        flops=2 * N_pad * N_pad * F_pad + 2 * N_pad * F_pad * C_pad
        + 5 * N_pad * C_pad,
        transcendentals=N_pad * C_pad,
        bytes_accessed=(N_pad * N_pad * 2 + N_pad * F_pad * 2
                        + F_pad * C_pad * 2 + N_pad * C_pad * 4),
    )

    # ---- hop 1: h = adj @ x -------------------------------------------------
    h = pl.pallas_call(
        functools.partial(_propagate_kernel, tk=tk, x_resident=x_res),
        out_shape=jax.ShapeDtypeStruct((N_pad, F_pad), jnp.bfloat16),
        grid_spec=pltpu.PrefetchScalarGridSpec(
            num_scalar_prefetch=0,
            grid=grid,
            in_specs=[adj_spec, feat_spec],
            out_specs=pl.BlockSpec((tm, F_pad), lambda i, k: (i, 0)),
            scratch_shapes=[pltpu.VMEM((tm, F_pad), jnp.float32)],
        ),
        compiler_params=cparams,
        cost_estimate=ce1,
    )(adj_p, x_p)

    # ---- hop 2 + fused classifier + log_softmax ------------------------------
    out_p = pl.pallas_call(
        functools.partial(_propagate_classify_kernel, tk=tk, x_resident=x_res),
        out_shape=jax.ShapeDtypeStruct((N_pad, C_pad), jnp.float32),
        grid_spec=pltpu.PrefetchScalarGridSpec(
            num_scalar_prefetch=0,
            grid=grid,
            in_specs=[
                adj_spec,
                feat_spec,
                pl.BlockSpec((F_pad, C_pad), lambda i, k: (0, 0)),  # W (resident)
                pl.BlockSpec((1, C_pad), lambda i, k: (0, 0)),      # bias (resident)
            ],
            out_specs=pl.BlockSpec((tm, C_pad), lambda i, k: (i, 0)),
            scratch_shapes=[pltpu.VMEM((tm, F_pad), jnp.float32)],
        ),
        compiler_params=cparams,
        cost_estimate=ce2,
    )(adj_p, h, w_p, b_p)

    return out_p[:N, :C]


def reference_forward(x, adj, w, b):
    # Mirrors the kernel's precision policy (bf16 MXU operands, f32 accumulation).
    adj_bf = adj.astype(jnp.bfloat16)
    h1 = jnp.dot(adj_bf, x.astype(jnp.bfloat16), preferred_element_type=jnp.float32)
    h2 = jnp.dot(adj_bf, h1.astype(jnp.bfloat16), preferred_element_type=jnp.float32)
    logits = jnp.dot(h2.astype(jnp.bfloat16), w.astype(jnp.bfloat16),
                     preferred_element_type=jnp.float32) + b
    return jax.nn.log_softmax(logits, axis=1)


if __name__ == "__main__":
    # Small, module-consistent shapes: N nodes, nfeat features, nclass=2.
    # At these toy sizes the kernel is launch-overhead dominated; the adaptive
    # tiling / residency logic above is what matters at real graph sizes.
    N, nfeat, nclass = 16, 32, 2

    key = jax.random.PRNGKey(0)
    kx, kadj, kw, kb = jax.random.split(key, 4)

    x = jax.random.normal(kx, (N, nfeat), dtype=jnp.float32)

    # Symmetric row-normalized adjacency with self-loops (typical GCN input).
    a = (jax.random.uniform(kadj, (N, N)) > 0.7).astype(jnp.float32)
    a = jnp.maximum(a, a.T) + jnp.eye(N, dtype=jnp.float32)
    deg = jnp.sum(a, axis=1, keepdims=True)
    adj = a / deg

    # Deterministic nn.Linear(nfeat, nclass)-style init (uniform +/- 1/sqrt(nfeat)).
    bound = 1.0 / jnp.sqrt(jnp.float32(nfeat))
    w = jax.random.uniform(kw, (nfeat, nclass), minval=-bound, maxval=bound,
                           dtype=jnp.float32)  # stored pre-transposed: [in, out]
    b = jax.random.uniform(kb, (1, nclass), minval=-bound, maxval=bound,
                           dtype=jnp.float32)

    # One jit over the whole wrapper: pad + bf16 cast fuse with the kernels.
    fwd = jax.jit(lightgcn_forward)
    out = jax.block_until_ready(fwd(x, adj, w, b))

    ref = reference_forward(x, adj, w, b)
    assert out.shape == (N, nclass)
    assert jnp.allclose(out, ref, atol=2e-3, rtol=2e-3), "mismatch vs reference"

    print("KERNEL_OK")
</pallas_src>

<mosaic_0001>
module attributes {stable_mosaic.version = 11 : i64} {
  func.func @_propagate_kernel(%arg0: i32, %arg1: i32, %arg2: memref<256x256xbf16, #tpu.memory_space<vmem>>, %arg3: memref<256x128xbf16, #tpu.memory_space<vmem>>, %arg4: memref<256x128xbf16, #tpu.memory_space<vmem>>, %arg5: memref<256x128xf32, #tpu.memory_space<vmem>>) attributes {dimension_semantics = [#tpu.dimension_semantics<parallel>, #tpu.dimension_semantics<arbitrary>], iteration_bounds = array<i64: 1, 1>, scalar_prefetch = 0 : i64, scratch_operands = 1 : i64, tpu.core_type = #tpu.core_type<tc>, window_params = [{transform_indices = @transform_0, window_bounds = array<i64: 256, 256>}, {pipeline_mode = #tpu.pipeline_mode<synchronous>, transform_indices = @transform_1, window_bounds = array<i64: 256, 128>}, {transform_indices = @transform_2, window_bounds = array<i64: 256, 128>}]} {
    %c0_i32 = arith.constant 0 : i32
    %0 = arith.cmpi eq, %arg1, %c0_i32 : i32
    %1 = arith.extui %0 : i1 to i32
    %c0_i32_0 = arith.constant 0 : i32
    %2 = arith.cmpi ne, %1, %c0_i32_0 : i32
    scf.if %2 {
      %cst_9 = arith.constant 0.000000e+00 : f32
      %15 = vector.broadcast %cst_9 : f32 to vector<256x128xf32>
      %c0_10 = arith.constant 0 : index
      %c0_11 = arith.constant 0 : index
      %16 = vector.load %arg5[%c0_10, %c0_11] : memref<256x128xf32, #tpu.memory_space<vmem>>, vector<256x128xf32>
      tpu.vector_store %arg5[%c0_10, %c0_11], %15 {strides = array<i32>} : memref<256x128xf32, #tpu.memory_space<vmem>>, vector<256x128xf32>,
    } else {
    }
    %c256_i32 = arith.constant 256 : i32
    %3 = arith.muli %arg1, %c256_i32 : i32
    %4 = tpu.assume_multiple %3, 256 : i32
    %5 = arith.index_cast %4 : i32 to index
    %c0 = arith.constant 0 : index
    %6 = vector.load %arg3[%5, %c0] : memref<256x128xbf16, #tpu.memory_space<vmem>>, vector<256x128xbf16>
    %c0_1 = arith.constant 0 : index
    %c0_2 = arith.constant 0 : index
    %7 = vector.load %arg5[%c0_1, %c0_2] : memref<256x128xf32, #tpu.memory_space<vmem>>, vector<256x128xf32>
    %c0_3 = arith.constant 0 : index
    %c0_4 = arith.constant 0 : index
    %8 = vector.load %arg2[%c0_3, %c0_4] : memref<256x256xbf16, #tpu.memory_space<vmem>>, vector<256x256xbf16>
    %cst = arith.constant dense<0.000000e+00> : vector<256x128xf32>
    %9 = tpu.matmul %8, %6, %cst {dimension_numbers = #tpu.dot_dimension_numbers<[1], [0], [0], [1], [0, 0, 1, 1], [], []>} : vector<256x256xbf16>, vector<256x128xbf16>, vector<256x128xf32> -> vector<256x128xf32>
    %10 = arith.addf %7, %9 : vector<256x128xf32>
    %c0_5 = arith.constant 0 : index
    %c0_6 = arith.constant 0 : index
    %11 = vector.load %arg5[%c0_5, %c0_6] : memref<256x128xf32, #tpu.memory_space<vmem>>, vector<256x128xf32>
    tpu.vector_store %arg5[%c0_5, %c0_6], %10 {strides = array<i32>} : memref<256x128xf32, #tpu.memory_space<vmem>>, vector<256x128xf32>,
    %c0_i32_7 = arith.constant 0 : i32
    %12 = arith.cmpi eq, %arg1, %c0_i32_7 : i32
    %13 = arith.extui %12 : i1 to i32
    %c0_i32_8 = arith.constant 0 : i32
    %14 = arith.cmpi ne, %13, %c0_i32_8 : i32
    scf.if %14 {
      %c0_9 = arith.constant 0 : index
      %c0_10 = arith.constant 0 : index
      %15 = vector.load %arg5[%c0_9, %c0_10] : memref<256x128xf32, #tpu.memory_space<vmem>>, vector<256x128xf32>
      %16 = arith.truncf %15 : vector<256x128xf32> to vector<256x128xbf16>
      %c0_11 = arith.constant 0 : index
      %c0_12 = arith.constant 0 : index
      %17 = vector.load %arg4[%c0_11, %c0_12] : memref<256x128xbf16, #tpu.memory_space<vmem>>, vector<256x128xbf16>
      tpu.vector_store %arg4[%c0_11, %c0_12], %16 {strides = array<i32>} : memref<256x128xbf16, #tpu.memory_space<vmem>>, vector<256x128xbf16>,
    } else {
    }
    return
  }
  func.func @transform_0(%arg0: i32, %arg1: i32) -> (i32, i32) {
    %c0_i32 = arith.constant 0 : i32
    return %arg0, %arg1 : i32, i32
  }
  func.func @transform_1(%arg0: i32, %arg1: i32) -> (i32, i32) {
    %c0_i32 = arith.constant 0 : i32
    %c0_i32_0 = arith.constant 0 : i32
    %c0_i32_1 = arith.constant 0 : i32
    return %c0_i32, %c0_i32_0 : i32, i32
  }
  func.func @transform_2(%arg0: i32, %arg1: i32) -> (i32, i32) {
    %c0_i32 = arith.constant 0 : i32
    %c0_i32_0 = arith.constant 0 : i32
    return %arg0, %c0_i32 : i32, i32
  }
}

module attributes {stable_mosaic.version = 11 : i64} {
  func.func @_propagate_classify_kernel(%arg0: i32, %arg1: i32, %arg2: memref<256x256xbf16, #tpu.memory_space<vmem>>, %arg3: memref<256x128xbf16, #tpu.memory_space<vmem>>, %arg4: memref<128x128xbf16, #tpu.memory_space<vmem>>, %arg5: memref<1x128xf32, #tpu.memory_space<vmem>>, %arg6: memref<256x128xf32, #tpu.memory_space<vmem>>, %arg7: memref<256x128xf32, #tpu.memory_space<vmem>>) attributes {dimension_semantics = [#tpu.dimension_semantics<parallel>, #tpu.dimension_semantics<arbitrary>], iteration_bounds = array<i64: 1, 1>, scalar_prefetch = 0 : i64, scratch_operands = 1 : i64, tpu.core_type = #tpu.core_type<tc>, window_params = [{transform_indices = @transform_0, window_bounds = array<i64: 256, 256>}, {pipeline_mode = #tpu.pipeline_mode<synchronous>, transform_indices = @transform_1, window_bounds = array<i64: 256, 128>}, {pipeline_mode = #tpu.pipeline_mode<synchronous>, transform_indices = @transform_2, window_bounds = array<i64: 128, 128>}, {pipeline_mode = #tpu.pipeline_mode<synchronous>, transform_indices = @transform_3, window_bounds = array<i64: 1, 128>}, {transform_indices = @transform_4, window_bounds = array<i64: 256, 128>}]} {
    %c0_i32 = arith.constant 0 : i32
    %0 = arith.cmpi eq, %arg1, %c0_i32 : i32
    %1 = arith.extui %0 : i1 to i32
    %c0_i32_0 = arith.constant 0 : i32
    %2 = arith.cmpi ne, %1, %c0_i32_0 : i32
    scf.if %2 {
      %cst_9 = arith.constant 0.000000e+00 : f32
      %15 = vector.broadcast %cst_9 : f32 to vector<256x128xf32>
      %c0_10 = arith.constant 0 : index
      %c0_11 = arith.constant 0 : index
      %16 = vector.load %arg7[%c0_10, %c0_11] : memref<256x128xf32, #tpu.memory_space<vmem>>, vector<256x128xf32>
      tpu.vector_store %arg7[%c0_10, %c0_11], %15 {strides = array<i32>} : memref<256x128xf32, #tpu.memory_space<vmem>>, vector<256x128xf32>,
    } else {
    }
    %c256_i32 = arith.constant 256 : i32
    %3 = arith.muli %arg1, %c256_i32 : i32
    %4 = tpu.assume_multiple %3, 256 : i32
    %5 = arith.index_cast %4 : i32 to index
    %c0 = arith.constant 0 : index
    %6 = vector.load %arg3[%5, %c0] : memref<256x128xbf16, #tpu.memory_space<vmem>>, vector<256x128xbf16>
    %c0_1 = arith.constant 0 : index
    %c0_2 = arith.constant 0 : index
    %7 = vector.load %arg7[%c0_1, %c0_2] : memref<256x128xf32, #tpu.memory_space<vmem>>, vector<256x128xf32>
    %c0_3 = arith.constant 0 : index
    %c0_4 = arith.constant 0 : index
    %8 = vector.load %arg2[%c0_3, %c0_4] : memref<256x256xbf16, #tpu.memory_space<vmem>>, vector<256x256xbf16>
    %cst = arith.constant dense<0.000000e+00> : vector<256x128xf32>
    %9 = tpu.matmul %8, %6, %cst {dimension_numbers = #tpu.dot_dimension_numbers<[1], [0], [0], [1], [0, 0, 1, 1], [], []>} : vector<256x256xbf16>, vector<256x128xbf16>, vector<256x128xf32> -> vector<256x128xf32>
    %10 = arith.addf %7, %9 : vector<256x128xf32>
    %c0_5 = arith.constant 0 : index
    %c0_6 = arith.constant 0 : index
    %11 = vector.load %arg7[%c0_5, %c0_6] : memref<256x128xf32, #tpu.memory_space<vmem>>, vector<256x128xf32>
    tpu.vector_store %arg7[%c0_5, %c0_6], %10 {strides = array<i32>} : memref<256x128xf32, #tpu.memory_space<vmem>>, vector<256x128xf32>,
    %c0_i32_7 = arith.constant 0 : i32
    %12 = arith.cmpi eq, %arg1, %c0_i32_7 : i32
    %13 = arith.extui %12 : i1 to i32
    %c0_i32_8 = arith.constant 0 : i32
    %14 = arith.cmpi ne, %13, %c0_i32_8 : i32
    scf.if %14 {
      %c0_9 = arith.constant 0 : index
      %c0_10 = arith.constant 0 : index
      %15 = vector.load %arg7[%c0_9, %c0_10] : memref<256x128xf32, #tpu.memory_space<vmem>>, vector<256x128xf32>
      %16 = arith.truncf %15 : vector<256x128xf32> to vector<256x128xbf16>
      %c0_11 = arith.constant 0 : index
      %c0_12 = arith.constant 0 : index
      %17 = vector.load %arg4[%c0_11, %c0_12] : memref<128x128xbf16, #tpu.memory_space<vmem>>, vector<128x128xbf16>
      %cst_13 = arith.constant dense<0.000000e+00> : vector<256x128xf32>
      %18 = tpu.matmul %16, %17, %cst_13 {dimension_numbers = #tpu.dot_dimension_numbers<[1], [0], [0], [1], [0, 0, 1, 1], [], []>} : vector<256x128xbf16>, vector<128x128xbf16>, vector<256x128xf32> -> vector<256x128xf32>
      %c0_14 = arith.constant 0 : index
      %c0_15 = arith.constant 0 : index
      %19 = vector.load %arg5[%c0_14, %c0_15] : memref<1x128xf32, #tpu.memory_space<vmem>>, vector<1x128xf32>
      %20 = vector.broadcast %19 : vector<1x128xf32> to vector<256x128xf32>
      %21 = arith.addf %18, %20 : vector<256x128xf32>
      %cst_16 = arith.constant dense<0xFF800000> : vector<256xf32>
      %22 = vector.multi_reduction <maximumf>, %21, %cst_16 [1] : vector<256x128xf32> to vector<256xf32>
      %23 = vector.shape_cast %22 : vector<256xf32> to vector<256x1xf32>
      %24 = vector.broadcast %23 : vector<256x1xf32> to vector<256x128xf32>
      %25 = arith.subf %21, %24 : vector<256x128xf32>
      %26 = math.exp %25 : vector<256x128xf32>
      %cst_17 = arith.constant dense<0.000000e+00> : vector<256xf32>
      %27 = vector.multi_reduction <add>, %26, %cst_17 [1] : vector<256x128xf32> to vector<256xf32>
      %28 = vector.shape_cast %27 : vector<256xf32> to vector<256x1xf32>
      %29 = math.log %28 : vector<256x1xf32>
      %30 = vector.broadcast %29 : vector<256x1xf32> to vector<256x128xf32>
      %31 = arith.subf %25, %30 : vector<256x128xf32>
      %c0_18 = arith.constant 0 : index
      %c0_19 = arith.constant 0 : index
      %32 = vector.load %arg6[%c0_18, %c0_19] : memref<256x128xf32, #tpu.memory_space<vmem>>, vector<256x128xf32>
      tpu.vector_store %arg6[%c0_18, %c0_19], %31 {strides = array<i32>} : memref<256x128xf32, #tpu.memory_space<vmem>>, vector<256x128xf32>,
    } else {
    }
    return
  }
  func.func @transform_0(%arg0: i32, %arg1: i32) -> (i32, i32) {
    %c0_i32 = arith.constant 0 : i32
    return %arg0, %arg1 : i32, i32
  }
  func.func @transform_1(%arg0: i32, %arg1: i32) -> (i32, i32) {
    %c0_i32 = arith.constant 0 : i32
    %c0_i32_0 = arith.constant 0 : i32
    %c0_i32_1 = arith.constant 0 : i32
    return %c0_i32, %c0_i32_0 : i32, i32
  }
  func.func @transform_2(%arg0: i32, %arg1: i32) -> (i32, i32) {
    %c0_i32 = arith.constant 0 : i32
    %c0_i32_0 = arith.constant 0 : i32
    %c0_i32_1 = arith.constant 0 : i32
    return %c0_i32, %c0_i32_0 : i32, i32
  }
  func.func @transform_3(%arg0: i32, %arg1: i32) -> (i32, i32) {
    %c0_i32 = arith.constant 0 : i32
    %c0_i32_0 = arith.constant 0 : i32
    %c0_i32_1 = arith.constant 0 : i32
    return %c0_i32, %c0_i32_0 : i32, i32
  }
  func.func @transform_4(%arg0: i32, %arg1: i32) -> (i32, i32) {
    %c0_i32 = arith.constant 0 : i32
    %c0_i32_0 = arith.constant 0 : i32
    return %arg0, %c0_i32 : i32, i32
  }
}

</mosaic_0001>

<llo_original>
// kernel: lightgcn_forward.2
$region0: #{lightgcn_forward.2}
  #allocation0 [shape = 'u32[]', space=smem, size = 0x4, offset = 0x4, fixed_abs, tag = 'smem constant byte address 0x4 - core index']
  #allocation1 [shape = 'u32[144,128]{1,0:T(1,128)}', space=vmem, size = 0x12000, scoped, tag = 'internal scratch']
  #allocation2 [shape = 'f32[256,128]{1,0:T(8,128)}', space=vmem, size = 0x20000, scoped, tag = 'scratch operand']
  %s0 = inlined_call_operand.vmem [shape: bf16[256,256], index: 0, kind: input, shape index: {}]
  %s1 = inlined_call_operand.vmem [shape: bf16[256,128], index: 1, kind: input, shape index: {}]
  %s2 = inlined_call_operand.vmem [shape: bf16[256,128], index: 2, kind: output, shape index: {}]
  %s3 = sld [smem:[#allocation0]]
  $region26: #{lightgcn_forward.2} parent=0
    _
  %s5 = ssub.s32 1, %s3
  %s6 = scalar_select 0, %s5, %s3
  // Predicated region
  $region2: #{lightgcn_forward.2} parent=0 // pred_check
    _
  $region3: #{lightgcn_forward.2} parent=0 // pred_check_branch
    %8 = sbr.rel (0) target = $region5
  $region4: #{lightgcn_forward.2} parent=0 // pred_region
    _
  $region5: #{lightgcn_forward.2} parent=0 // pred_fallthru
    _
  // Predicated region
  $region6: #{lightgcn_forward.2} parent=0 // pred_check
    _
  $region7: #{lightgcn_forward.2} parent=0 // pred_check_branch
    %10 = sbr.rel (0) target = $region9
  $region8: #{lightgcn_forward.2} parent=0 // pred_region
    _
  $region9: #{lightgcn_forward.2} parent=0 // pred_fallthru
    _
  %p12 = scmp.eq.s32.totalorder 0, 0
  // Predicated region
  $region10: #{lightgcn_forward.2} parent=0 // pred_check
    %p13 = pneg %p12
  $region11: #{lightgcn_forward.2} parent=0 // pred_check_branch
    %15 = sbr.rel (%p13) target = $region13
  $region12: #{lightgcn_forward.2} parent=0 // pred_region
    %16 = vst [vmem:[#allocation2] sm:$0xff] 0.0
    %17 = vst [vmem:[#allocation2 + $0x8] sm:$0xff] 0.0
    %18 = vst [vmem:[#allocation2 + $0x10] sm:$0xff] 0.0
    %19 = vst [vmem:[#allocation2 + $0x18] sm:$0xff] 0.0
    %20 = vst [vmem:[#allocation2 + $0x20] sm:$0xff] 0.0
    %21 = vst [vmem:[#allocation2 + $0x28] sm:$0xff] 0.0
    %22 = vst [vmem:[#allocation2 + $0x30] sm:$0xff] 0.0
    %23 = vst [vmem:[#allocation2 + $0x38] sm:$0xff] 0.0
    %24 = vst [vmem:[#allocation2 + $0x40] sm:$0xff] 0.0
    %25 = vst [vmem:[#allocation2 + $0x48] sm:$0xff] 0.0
    %26 = vst [vmem:[#allocation2 + $0x50] sm:$0xff] 0.0
    %27 = vst [vmem:[#allocation2 + $0x58] sm:$0xff] 0.0
    %28 = vst [vmem:[#allocation2 + $0x60] sm:$0xff] 0.0
    %29 = vst [vmem:[#allocation2 + $0x68] sm:$0xff] 0.0
    %30 = vst [vmem:[#allocation2 + $0x70] sm:$0xff] 0.0
    %31 = vst [vmem:[#allocation2 + $0x78] sm:$0xff] 0.0
    %32 = vst [vmem:[#allocation2 + $0x80] sm:$0xff] 0.0
    %33 = vst [vmem:[#allocation2 + $0x88] sm:$0xff] 0.0
    %34 = vst [vmem:[#allocation2 + $0x90] sm:$0xff] 0.0
    %35 = vst [vmem:[#allocation2 + $0x98] sm:$0xff] 0.0
    %36 = vst [vmem:[#allocation2 + $0xa0] sm:$0xff] 0.0
    %37 = vst [vmem:[#allocation2 + $0xa8] sm:$0xff] 0.0
    %38 = vst [vmem:[#allocation2 + $0xb0] sm:$0xff] 0.0
    %39 = vst [vmem:[#allocation2 + $0xb8] sm:$0xff] 0.0
    %40 = vst [vmem:[#allocation2 + $0xc0] sm:$0xff] 0.0
    %41 = vst [vmem:[#allocation2 + $0xc8] sm:$0xff] 0.0
    %42 = vst [vmem:[#allocation2 + $0xd0] sm:$0xff] 0.0
    %43 = vst [vmem:[#allocation2 + $0xd8] sm:$0xff] 0.0
    %44 = vst [vmem:[#allocation2 + $0xe0] sm:$0xff] 0.0
    %45 = vst [vmem:[#allocation2 + $0xe8] sm:$0xff] 0.0
    %46 = vst [vmem:[#allocation2 + $0xf0] sm:$0xff] 0.0
    %47 = vst [vmem:[#allocation2 + $0xf8] sm:$0xff] 0.0
  $region13: #{lightgcn_forward.2} parent=0 // pred_fallthru
    _
  %s48 = smul.u32 0, 256
  %s49 = sshra.s32 %s48, 3
  %s50 = sand.u32 %s48, 7
  %s51 = smul.addr %s49, 4
  %s52 = scalar_lea.vmem %s1, %s51
  %v53 = vld [vmem:[%s52] sm:$0xf]
  %v54 = vld [vmem:[%s52 + $0x4] sm:$0xf]
  %v55 = vld [vmem:[%s52 + $0x8] sm:$0xf]
  %v56 = vld [vmem:[%s52 + $0xc] sm:$0xf]
  %v57 = vld [vmem:[%s52 + $0x10] sm:$0xf]
  %v58 = vld [vmem:[%s52 + $0x14] sm:$0xf]
  %v59 = vld [vmem:[%s52 + $0x18] sm:$0xf]
  %v60 = vld [vmem:[%s52 + $0x1c] sm:$0xf]
  %v61 = vld [vmem:[%s52 + $0x20] sm:$0xf]
  %v62 = vld [vmem:[%s52 + $0x24] sm:$0xf]
  %v63 = vld [vmem:[%s52 + $0x28] sm:$0xf]
  %v64 = vld [vmem:[%s52 + $0x2c] sm:$0xf]
  %v65 = vld [vmem:[%s52 + $0x30] sm:$0xf]
  %v66 = vld [vmem:[%s52 + $0x34] sm:$0xf]
  %v67 = vld [vmem:[%s52 + $0x38] sm:$0xf]
  %v68 = vld [vmem:[%s52 + $0x3c] sm:$0xf]
  %v69 = vld [vmem:[%s52 + $0x40] sm:$0xf]
  %v70 = vld [vmem:[%s52 + $0x44] sm:$0xf]
  %v71 = vld [vmem:[%s52 + $0x48] sm:$0xf]
  %v72 = vld [vmem:[%s52 + $0x4c] sm:$0xf]
  %v73 = vld [vmem:[%s52 + $0x50] sm:$0xf]
  %v74 = vld [vmem:[%s52 + $0x54] sm:$0xf]
  %v75 = vld [vmem:[%s52 + $0x58] sm:$0xf]
  %v76 = vld [vmem:[%s52 + $0x5c] sm:$0xf]
  %v77 = vld [vmem:[%s52 + $0x60] sm:$0xf]
  %v78 = vld [vmem:[%s52 + $0x64] sm:$0xf]
  %v79 = vld [vmem:[%s52 + $0x68] sm:$0xf]
  %v80 = vld [vmem:[%s52 + $0x6c] sm:$0xf]
  %v81 = vld [vmem:[%s52 + $0x70] sm:$0xf]
  %v82 = vld [vmem:[%s52 + $0x74] sm:$0xf]
  %v83 = vld [vmem:[%s52 + $0x78] sm:$0xf]
  %v84 = vld [vmem:[%s52 + $0x7c] sm:$0xf]
  %v85 = vld [vmem:[#allocation2] sm:$0xff]
  %v86 = vld [vmem:[#allocation2 + $0x8] sm:$0xff]
  %v87 = vld [vmem:[#allocation2 + $0x10] sm:$0xff]
  %v88 = vld [vmem:[#allocation2 + $0x18] sm:$0xff]
  %v89 = vld [vmem:[#allocation2 + $0x20] sm:$0xff]
  %v90 = vld [vmem:[#allocation2 + $0x28] sm:$0xff]
  %v91 = vld [vmem:[#allocation2 + $0x30] sm:$0xff]
  %v92 = vld [vmem:[#allocation2 + $0x38] sm:$0xff]
  %v93 = vld [vmem:[#allocation2 + $0x40] sm:$0xff]
  %v94 = vld [vmem:[#allocation2 + $0x48] sm:$0xff]
  %v95 = vld [vmem:[#allocation2 + $0x50] sm:$0xff]
  %v96 = vld [vmem:[#allocation2 + $0x58] sm:$0xff]
  %v97 = vld [vmem:[#allocation2 + $0x60] sm:$0xff]
  %v98 = vld [vmem:[#allocation2 + $0x68] sm:$0xff]
  %v99 = vld [vmem:[#allocation2 + $0x70] sm:$0xff]
  %v100 = vld [vmem:[#allocation2 + $0x78] sm:$0xff]
  %v101 = vld [vmem:[#allocation2 + $0x80] sm:$0xff]
  %v102 = vld [vmem:[#allocation2 + $0x88] sm:$0xff]
  %v103 = vld [vmem:[#allocation2 + $0x90] sm:$0xff]
  %v104 = vld [vmem:[#allocation2 + $0x98] sm:$0xff]
  %v105 = vld [vmem:[#allocation2 + $0xa0] sm:$0xff]
  %v106 = vld [vmem:[#allocation2 + $0xa8] sm:$0xff]
  %v107 = vld [vmem:[#allocation2 + $0xb0] sm:$0xff]
  %v108 = vld [vmem:[#allocation2 + $0xb8] sm:$0xff]
  %v109 = vld [vmem:[#allocation2 + $0xc0] sm:$0xff]
  %v110 = vld [vmem:[#allocation2 + $0xc8] sm:$0xff]
  %v111 = vld [vmem:[#allocation2 + $0xd0] sm:$0xff]
  %v112 = vld [vmem:[#allocation2 + $0xd8] sm:$0xff]
  %v113 = vld [vmem:[#allocation2 + $0xe0] sm:$0xff]
  %v114 = vld [vmem:[#allocation2 + $0xe8] sm:$0xff]
  %v115 = vld [vmem:[#allocation2 + $0xf0] sm:$0xff]
  %v116 = vld [vmem:[#allocation2 + $0xf8] sm:$0xff]
  %v117 = vld [vmem:[%s0] sm:$0xff]
  %v118 = vld [vmem:[%s0 + $0x8] sm:$0xff]
  %v119 = vld [vmem:[%s0 + $0x10] sm:$0xff]
  %v120 = vld [vmem:[%s0 + $0x18] sm:$0xff]
  %v121 = vld [vmem:[%s0 + $0x20] sm:$0xff]
  %v122 = vld [vmem:[%s0 + $0x28] sm:$0xff]
  %v123 = vld [vmem:[%s0 + $0x30] sm:$0xff]
  %v124 = vld [vmem:[%s0 + $0x38] sm:$0xff]
  %v125 = vld [vmem:[%s0 + $0x40] sm:$0xff]
  %v126 = vld [vmem:[%s0 + $0x48] sm:$0xff]
  %v127 = vld [vmem:[%s0 + $0x50] sm:$0xff]
  %v128 = vld [vmem:[%s0 + $0x58] sm:$0xff]
  %v129 = vld [vmem:[%s0 + $0x60] sm:$0xff]
  %v130 = vld [vmem:[%s0 + $0x68] sm:$0xff]
  %v131 = vld [vmem:[%s0 + $0x70] sm:$0xff]
  %v132 = vld [vmem:[%s0 + $0x78] sm:$0xff]
  %v133 = vld [vmem:[%s0 + $0x80] sm:$0xff]
  %v134 = vld [vmem:[%s0 + $0x88] sm:$0xff]
  %v135 = vld [vmem:[%s0 + $0x90] sm:$0xff]
  %v136 = vld [vmem:[%s0 + $0x98] sm:$0xff]
  %v137 = vld [vmem:[%s0 + $0xa0] sm:$0xff]
  %v138 = vld [vmem:[%s0 + $0xa8] sm:$0xff]
  %v139 = vld [vmem:[%s0 + $0xb0] sm:$0xff]
  %v140 = vld [vmem:[%s0 + $0xb8] sm:$0xff]
  %v141 = vld [vmem:[%s0 + $0xc0] sm:$0xff]
  %v142 = vld [vmem:[%s0 + $0xc8] sm:$0xff]
  %v143 = vld [vmem:[%s0 + $0xd0] sm:$0xff]
  %v144 = vld [vmem:[%s0 + $0xd8] sm:$0xff]
  %v145 = vld [vmem:[%s0 + $0xe0] sm:$0xff]
  %v146 = vld [vmem:[%s0 + $0xe8] sm:$0xff]
  %v147 = vld [vmem:[%s0 + $0xf0] sm:$0xff]
  %v148 = vld [vmem:[%s0 + $0xf8] sm:$0xff]
  %v181 = vunpack.c.l.b16 %v117
  %v182 = vunpack.c.h.b16 %v117
  %v183 = vunpack.c.l.b16 %v118
  %v184 = vunpack.c.h.b16 %v118
  %v185 = vunpack.c.l.b16 %v119
  %v186 = vunpack.c.h.b16 %v119
  %v187 = vunpack.c.l.b16 %v120
  %v188 = vunpack.c.h.b16 %v120
  %v189 = vunpack.c.l.b16 %v121
  %v190 = vunpack.c.h.b16 %v121
  %v191 = vunpack.c.l.b16 %v122
  %v192 = vunpack.c.h.b16 %v122
  %v193 = vunpack.c.l.b16 %v123
  %v194 = vunpack.c.h.b16 %v123
  %v195 = vunpack.c.l.b16 %v124
  %v196 = vunpack.c.h.b16 %v124
  %v197 = vunpack.c.l.b16 %v125
  %v198 = vunpack.c.h.b16 %v125
  %v199 = vunpack.c.l.b16 %v126
  %v200 = vunpack.c.h.b16 %v126
  %v201 = vunpack.c.l.b16 %v127
  %v202 = vunpack.c.h.b16 %v127
  %v203 = vunpack.c.l.b16 %v128
  %v204 = vunpack.c.h.b16 %v128
  %v205 = vunpack.c.l.b16 %v129
  %v206 = vunpack.c.h.b16 %v129
  %v207 = vunpack.c.l.b16 %v130
  %v208 = vunpack.c.h.b16 %v130
  %v209 = vunpack.c.l.b16 %v131
  %v210 = vunpack.c.h.b16 %v131
  %v211 = vunpack.c.l.b16 %v132
  %v212 = vunpack.c.h.b16 %v132
  %v213 = vunpack.c.l.b16 %v133
  %v214 = vunpack.c.h.b16 %v133
  %v215 = vunpack.c.l.b16 %v134
  %v216 = vunpack.c.h.b16 %v134
  %v217 = vunpack.c.l.b16 %v135
  %v218 = vunpack.c.h.b16 %v135
  %v219 = vunpack.c.l.b16 %v136
  %v220 = vunpack.c.h.b16 %v136
  %v221 = vunpack.c.l.b16 %v137
  %v222 = vunpack.c.h.b16 %v137
  %v223 = vunpack.c.l.b16 %v138
  %v224 = vunpack.c.h.b16 %v138
  %v225 = vunpack.c.l.b16 %v139
  %v226 = vunpack.c.h.b16 %v139
  %v227 = vunpack.c.l.b16 %v140
  %v228 = vunpack.c.h.b16 %v140
  %v229 = vunpack.c.l.b16 %v141
  %v230 = vunpack.c.h.b16 %v141
  %v231 = vunpack.c.l.b16 %v142
  %v232 = vunpack.c.h.b16 %v142
  %v233 = vunpack.c.l.b16 %v143
  %v234 = vunpack.c.h.b16 %v143
  %v235 = vunpack.c.l.b16 %v144
  %v236 = vunpack.c.h.b16 %v144
  %v237 = vunpack.c.l.b16 %v145
  %v238 = vunpack.c.h.b16 %v145
  %v239 = vunpack.c.l.b16 %v146
  %v240 = vunpack.c.h.b16 %v146
  %v241 = vunpack.c.l.b16 %v147
  %v242 = vunpack.c.h.b16 %v147
  %v243 = vunpack.c.l.b16 %v148
  %v244 = vunpack.c.h.b16 %v148
  %v245 = vpack.c.b16 %v183, %v181
  %v246 = vpack.c.b16 %v184, %v182
  %v247 = vpack.c.b16 %v187, %v185
  %v248 = vpack.c.b16 %v188, %v186
  %v249 = vpack.c.b16 %v191, %v189
  %v250 = vpack.c.b16 %v192, %v190
  %v251 = vpack.c.b16 %v195, %v193
  %v252 = vpack.c.b16 %v196, %v194
  %v253 = vpack.c.b16 %v199, %v197
  %v254 = vpack.c.b16 %v200, %v198
  %v255 = vpack.c.b16 %v203, %v201
  %v256 = vpack.c.b16 %v204, %v202
  %v257 = vpack.c.b16 %v207, %v205
  %v258 = vpack.c.b16 %v208, %v206
  %v259 = vpack.c.b16 %v211, %v209
  %v260 = vpack.c.b16 %v212, %v210
  %v261 = vpack.c.b16 %v215, %v213
  %v262 = vpack.c.b16 %v216, %v214
  %v263 = vpack.c.b16 %v219, %v217
  %v264 = vpack.c.b16 %v220, %v218
  %v265 = vpack.c.b16 %v223, %v221
  %v266 = vpack.c.b16 %v224, %v222
  %v267 = vpack.c.b16 %v227, %v225
  %v268 = vpack.c.b16 %v228, %v226
  %v269 = vpack.c.b16 %v231, %v229
  %v270 = vpack.c.b16 %v232, %v230
  %v271 = vpack.c.b16 %v235, %v233
  %v272 = vpack.c.b16 %v236, %v234
  %v273 = vpack.c.b16 %v239, %v237
  %v274 = vpack.c.b16 %v240, %v238
  %v275 = vpack.c.b16 %v243, %v241
  %v276 = vpack.c.b16 %v244, %v242
  %v341 = vunpack.c.l.b16 %v53
  %v342 = vunpack.c.l.b16 %v54
  %v343 = vunpack.c.l.b16 %v55
  %v344 = vunpack.c.l.b16 %v56
  %v345 = vunpack.c.l.b16 %v57
  %v346 = vunpack.c.l.b16 %v58
  %v347 = vunpack.c.l.b16 %v59
  %v348 = vunpack.c.l.b16 %v60
  %v349 = vunpack.c.l.b16 %v61
  %v350 = vunpack.c.l.b16 %v62
  %v351 = vunpack.c.l.b16 %v63
  %v352 = vunpack.c.l.b16 %v64
  %v353 = vunpack.c.l.b16 %v65
  %v354 = vunpack.c.l.b16 %v66
  %v355 = vunpack.c.l.b16 %v67
  %v356 = vunpack.c.l.b16 %v68
  %v357 = vunpack.c.l.b16 %v69
  %v358 = vunpack.c.l.b16 %v70
  %v359 = vunpack.c.l.b16 %v71
  %v360 = vunpack.c.l.b16 %v72
  %v361 = vunpack.c.l.b16 %v73
  %v362 = vunpack.c.l.b16 %v74
  %v363 = vunpack.c.l.b16 %v75
  %v364 = vunpack.c.l.b16 %v76
  %v365 = vunpack.c.l.b16 %v77
  %v366 = vunpack.c.l.b16 %v78
  %v367 = vunpack.c.l.b16 %v79
  %v368 = vunpack.c.l.b16 %v80
  %v369 = vunpack.c.l.b16 %v81
  %v370 = vunpack.c.l.b16 %v82
  %v371 = vunpack.c.l.b16 %v83
  %v372 = vunpack.c.l.b16 %v84
  %v373 = vpack.c.b16 %v342, %v341
  %v374 = vpack.c.b16 %v344, %v343
  %v375 = vpack.c.b16 %v346, %v345
  %v376 = vpack.c.b16 %v348, %v347
  %v377 = vpack.c.b16 %v350, %v349
  %v378 = vpack.c.b16 %v352, %v351
  %v379 = vpack.c.b16 %v354, %v353
  %v380 = vpack.c.b16 %v356, %v355
  %v381 = vpack.c.b16 %v358, %v357
  %v382 = vpack.c.b16 %v360, %v359
  %v383 = vpack.c.b16 %v362, %v361
  %v384 = vpack.c.b16 %v364, %v363
  %v385 = vpack.c.b16 %v366, %v365
  %v386 = vpack.c.b16 %v368, %v367
  %v387 = vpack.c.b16 %v370, %v369
  %v388 = vpack.c.b16 %v372, %v371
  %405 = vmatprep.subr.bf16.mxu0 0
  %406 = vmatpush1.bf16.msra.mxu0 %v373
  %407 = vmatprep.subr.bf16.mxu0 0
  %408 = vmatpush1.bf16.msra.mxu0 %v374
  %409 = vmatprep.subr.bf16.mxu0 0
  %410 = vmatpush1.bf16.msra.mxu0 %v375
  %411 = vmatprep.subr.bf16.mxu0 0
  %412 = vmatpush1.bf16.msra.mxu0 %v376
  %413 = vmatprep.subr.bf16.mxu0 0
  %414 = vmatpush1.bf16.msra.mxu0 %v377
  %415 = vmatprep.subr.bf16.mxu0 0
  %416 = vmatpush1.bf16.msra.mxu0 %v378
  %417 = vmatprep.subr.bf16.mxu0 0
  %418 = vmatpush1.bf16.msra.mxu0 %v379
  %419 = vmatprep.subr.bf16.mxu0 0
  %420 = vmatpush1.bf16.msra.mxu0 %v380
  %421 = vmatprep.subr.bf16.mxu0 0
  %422 = vmatpush1.bf16.msra.mxu0 %v381
  %423 = vmatprep.subr.bf16.mxu0 0
  %424 = vmatpush1.bf16.msra.mxu0 %v382
  %425 = vmatprep.subr.bf16.mxu0 0
  %426 = vmatpush1.bf16.msra.mxu0 %v383
  %427 = vmatprep.subr.bf16.mxu0 0
  %428 = vmatpush1.bf16.msra.mxu0 %v384
  %429 = vmatprep.subr.bf16.mxu0 0
  %430 = vmatpush1.bf16.msra.mxu0 %v385
  %431 = vmatprep.subr.bf16.mxu0 0
  %432 = vmatpush1.bf16.msra.mxu0 %v386
  %433 = vmatprep.subr.bf16.mxu0 0
  %434 = vmatpush1.bf16.msra.mxu0 %v387
  %435 = vmatprep.subr.bf16.mxu0 0
  %436 = vmatpush1.bf16.msra.mxu0 %v388
  %437 = vmatprep.mubr.bf16.mxu0 %v246
  %438 = vmatmul.mubr.bf16.gmra.mrb[0].mxu0 %v245
  %v439 = vpop.f32.mrb[0].mxu0
  %v440 = vadd.f32 0.0, %v439
  %v441 = vpop.f32.mrb[0].mxu0
  %v442 = vpop.f32.mrb[0].mxu0
  %v443 = vadd.f32 0.0, %v442
  %v444 = vpop.f32.mrb[0].mxu0
  %445 = vmatprep.mubr.bf16.mxu0 %v248
  %446 = vmatmul.mubr.bf16.gmra.mrb[0].mxu0 %v247
  %v447 = vpop.f32.mrb[0].mxu0
  %v448 = vadd.f32 0.0, %v447
  %v449 = vpop.f32.mrb[0].mxu0
  %v450 = vpop.f32.mrb[0].mxu0
  %v451 = vadd.f32 0.0, %v450
  %v452 = vpop.f32.mrb[0].mxu0
  %453 = vmatprep.mubr.bf16.mxu0 %v250
  %454 = vmatmul.mubr.bf16.gmra.mrb[0].mxu0 %v249
  %v455 = vpop.f32.mrb[0].mxu0
  %v456 = vadd.f32 0.0, %v455
  %v457 = vpop.f32.mrb[0].mxu0
  %v458 = vpop.f32.mrb[0].mxu0
  %v459 = vadd.f32 0.0, %v458
  %v460 = vpop.f32.mrb[0].mxu0
  %461 = vmatprep.mubr.bf16.mxu0 %v252
  %462 = vmatmul.mubr.bf16.gmra.mrb[0].mxu0 %v251
  %v463 = vpop.f32.mrb[0].mxu0
  %v464 = vadd.f32 0.0, %v463
  %v465 = vpop.f32.mrb[0].mxu0
  %v466 = vpop.f32.mrb[0].mxu0
  %v467 = vadd.f32 0.0, %v466
  %v468 = vpop.f32.mrb[0].mxu0
  %469 = vmatprep.mubr.bf16.mxu0 %v254
  %470 = vmatmul.mubr.bf16.gmra.mrb[0].mxu0 %v253
  %v471 = vpop.f32.mrb[0].mxu0
  %v472 = vadd.f32 0.0, %v471
  %v473 = vpop.f32.mrb[0].mxu0
  %v474 = vpop.f32.mrb[0].mxu0
  %v475 = vadd.f32 0.0, %v474
  %v476 = vpop.f32.mrb[0].mxu0
  %477 = vmatprep.mubr.bf16.mxu0 %v256
  %478 = vmatmul.mubr.bf16.gmra.mrb[0].mxu0 %v255
  %v479 = vpop.f32.mrb[0].mxu0
  %v480 = vadd.f32 0.0, %v479
  %v481 = vpop.f32.mrb[0].mxu0
  %v482 = vpop.f32.mrb[0].mxu0
  %v483 = vadd.f32 0.0, %v482
  %v484 = vpop.f32.mrb[0].mxu0
  %485 = vmatprep.mubr.bf16.mxu0 %v258
  %486 = vmatmul.mubr.bf16.gmra.mrb[0].mxu0 %v257
  %v487 = vpop.f32.mrb[0].mxu0
  %v488 = vadd.f32 0.0, %v487
  %v489 = vpop.f32.mrb[0].mxu0
  %v490 = vpop.f32.mrb[0].mxu0
  %v491 = vadd.f32 0.0, %v490
  %v492 = vpop.f32.mrb[0].mxu0
  %493 = vmatprep.mubr.bf16.mxu0 %v260
  %494 = vmatmul.mubr.bf16.gmra.mrb[0].mxu0 %v259
  %v495 = vpop.f32.mrb[0].mxu0
  %v496 = vadd.f32 0.0, %v495
  %v497 = vpop.f32.mrb[0].mxu0
  %v498 = vpop.f32.mrb[0].mxu0
  %v499 = vadd.f32 0.0, %v498
  %v500 = vpop.f32.mrb[0].mxu0
  %501 = vmatprep.mubr.bf16.mxu0 %v262
  %502 = vmatmul.mubr.bf16.gmra.mrb[0].mxu0 %v261
  %v503 = vpop.f32.mrb[0].mxu0
  %v504 = vadd.f32 0.0, %v503
  %v505 = vpop.f32.mrb[0].mxu0
  %v506 = vpop.f32.mrb[0].mxu0
  %v507 = vadd.f32 0.0, %v506
  %v508 = vpop.f32.mrb[0].mxu0
  %509 = vmatprep.mubr.bf16.mxu0 %v264
  %510 = vmatmul.mubr.bf16.gmra.mrb[0].mxu0 %v263
  %v511 = vpop.f32.mrb[0].mxu0
  %v512 = vadd.f32 0.0, %v511
  %v513 = vpop.f32.mrb[0].mxu0
  %v514 = vpop.f32.mrb[0].mxu0
  %v515 = vadd.f32 0.0, %v514
  %v516 = vpop.f32.mrb[0].mxu0
  %517 = vmatprep.mubr.bf16.mxu0 %v266
  %518 = vmatmul.mubr.bf16.gmra.mrb[0].mxu0 %v265
  %v519 = vpop.f32.mrb[0].mxu0
  %v520 = vadd.f32 0.0, %v519
  %v521 = vpop.f32.mrb[0].mxu0
  %v522 = vpop.f32.mrb[0].mxu0
  %v523 = vadd.f32 0.0, %v522
  %v524 = vpop.f32.mrb[0].mxu0
  %525 = vmatprep.mubr.bf16.mxu0 %v268
  %526 = vmatmul.mubr.bf16.gmra.mrb[0].mxu0 %v267
  %v527 = vpop.f32.mrb[0].mxu0
  %v528 = vadd.f32 0.0, %v527
  %v529 = vpop.f32.mrb[0].mxu0
  %v530 = vpop.f32.mrb[0].mxu0
  %v531 = vadd.f32 0.0, %v530
  %v532 = vpop.f32.mrb[0].mxu0
  %533 = vmatprep.mubr.bf16.mxu0 %v270
  %534 = vmatmul.mubr.bf16.gmra.mrb[0].mxu0 %v269
  %v535 = vpop.f32.mrb[0].mxu0
  %v536 = vadd.f32 0.0, %v535
  %v537 = vpop.f32.mrb[0].mxu0
  %v538 = vpop.f32.mrb[0].mxu0
  %v539 = vadd.f32 0.0, %v538
  %v540 = vpop.f32.mrb[0].mxu0
  %541 = vmatprep.mubr.bf16.mxu0 %v272
  %542 = vmatmul.mubr.bf16.gmra.mrb[0].mxu0 %v271
  %v543 = vpop.f32.mrb[0].mxu0
  %v544 = vadd.f32 0.0, %v543
  %v545 = vpop.f32.mrb[0].mxu0
  %v546 = vpop.f32.mrb[0].mxu0
  %v547 = vadd.f32 0.0, %v546
  %v548 = vpop.f32.mrb[0].mxu0
  %549 = vmatprep.mubr.bf16.mxu0 %v274
  %550 = vmatmul.mubr.bf16.gmra.mrb[0].mxu0 %v273
  %v551 = vpop.f32.mrb[0].mxu0
  %v552 = vadd.f32 0.0, %v551
  %v553 = vpop.f32.mrb[0].mxu0
  %v554 = vpop.f32.mrb[0].mxu0
  %v555 = vadd.f32 0.0, %v554
  %v556 = vpop.f32.mrb[0].mxu0
  %557 = vmatprep.mubr.bf16.mxu0 %v276
  %558 = vmatmul.mubr.bf16.gmra.mrb[0].mxu0 %v275
  %v559 = vpop.f32.mrb[0].mxu0
  %v560 = vadd.f32 0.0, %v559
  %v561 = vpop.f32.mrb[0].mxu0
  %v562 = vpop.f32.mrb[0].mxu0
  %v563 = vadd.f32 0.0, %v562
  %v564 = vpop.f32.mrb[0].mxu0
  %565 = vdwg.mxu0
  %v566 = vadd.f32 %v85, %v440
  %v567 = vadd.f32 %v86, %v443
  %v568 = vadd.f32 %v87, %v448
  %v569 = vadd.f32 %v88, %v451
  %v570 = vadd.f32 %v89, %v456
  %v571 = vadd.f32 %v90, %v459
  %v572 = vadd.f32 %v91, %v464
  %v573 = vadd.f32 %v92, %v467
  %v574 = vadd.f32 %v93, %v472
  %v575 = vadd.f32 %v94, %v475
  %v576 = vadd.f32 %v95, %v480
  %v577 = vadd.f32 %v96, %v483
  %v578 = vadd.f32 %v97, %v488
  %v579 = vadd.f32 %v98, %v491
  %v580 = vadd.f32 %v99, %v496
  %v581 = vadd.f32 %v100, %v499
  %v582 = vadd.f32 %v101, %v504
  %v583 = vadd.f32 %v102, %v507
  %v584 = vadd.f32 %v103, %v512
  %v585 = vadd.f32 %v104, %v515
  %v586 = vadd.f32 %v105, %v520
  %v587 = vadd.f32 %v106, %v523
  %v588 = vadd.f32 %v107, %v528
  %v589 = vadd.f32 %v108, %v531
  %v590 = vadd.f32 %v109, %v536
  %v591 = vadd.f32 %v110, %v539
  %v592 = vadd.f32 %v111, %v544
  %v593 = vadd.f32 %v112, %v547
  %v594 = vadd.f32 %v113, %v552
  %v595 = vadd.f32 %v114, %v555
  %v596 = vadd.f32 %v115, %v560
  %v597 = vadd.f32 %v116, %v563
  %598 = vst [vmem:[#allocation2] sm:$0xff] %v566
  %599 = vst [vmem:[#allocation2 + $0x8] sm:$0xff] %v567
  %600 = vst [vmem:[#allocation2 + $0x10] sm:$0xff] %v568
  %601 = vst [vmem:[#allocation2 + $0x18] sm:$0xff] %v569
  %602 = vst [vmem:[#allocation2 + $0x20] sm:$0xff] %v570
  %603 = vst [vmem:[#allocation2 + $0x28] sm:$0xff] %v571
  %604 = vst [vmem:[#allocation2 + $0x30] sm:$0xff] %v572
  %605 = vst [vmem:[#allocation2 + $0x38] sm:$0xff] %v573
  %606 = vst [vmem:[#allocation2 + $0x40] sm:$0xff] %v574
  %607 = vst [vmem:[#allocation2 + $0x48] sm:$0xff] %v575
  %608 = vst [vmem:[#allocation2 + $0x50] sm:$0xff] %v576
  %609 = vst [vmem:[#allocation2 + $0x58] sm:$0xff] %v577
  %610 = vst [vmem:[#allocation2 + $0x60] sm:$0xff] %v578
  %611 = vst [vmem:[#allocation2 + $0x68] sm:$0xff] %v579
  %612 = vst [vmem:[#allocation2 + $0x70] sm:$0xff] %v580
  %613 = vst [vmem:[#allocation2 + $0x78] sm:$0xff] %v581
  %614 = vst [vmem:[#allocation2 + $0x80] sm:$0xff] %v582
  %615 = vst [vmem:[#allocation2 + $0x88] sm:$0xff] %v583
  %616 = vst [vmem:[#allocation2 + $0x90] sm:$0xff] %v584
  %617 = vst [vmem:[#allocation2 + $0x98] sm:$0xff] %v585
  %618 = vst [vmem:[#allocation2 + $0xa0] sm:$0xff] %v586
  %619 = vst [vmem:[#allocation2 + $0xa8] sm:$0xff] %v587
  %620 = vst [vmem:[#allocation2 + $0xb0] sm:$0xff] %v588
  %621 = vst [vmem:[#allocation2 + $0xb8] sm:$0xff] %v589
  %622 = vst [vmem:[#allocation2 + $0xc0] sm:$0xff] %v590
  %623 = vst [vmem:[#allocation2 + $0xc8] sm:$0xff] %v591
  %624 = vst [vmem:[#allocation2 + $0xd0] sm:$0xff] %v592
  %625 = vst [vmem:[#allocation2 + $0xd8] sm:$0xff] %v593
  %626 = vst [vmem:[#allocation2 + $0xe0] sm:$0xff] %v594
  %627 = vst [vmem:[#allocation2 + $0xe8] sm:$0xff] %v595
  %628 = vst [vmem:[#allocation2 + $0xf0] sm:$0xff] %v596
  %629 = vst [vmem:[#allocation2 + $0xf8] sm:$0xff] %v597
  // Predicated region
  $region14: #{lightgcn_forward.2} parent=0 // pred_check
    %p630 = pneg %p12
  $region15: #{lightgcn_forward.2} parent=0 // pred_check_branch
    %632 = sbr.rel (%p630) target = $region17
  $region16: #{lightgcn_forward.2} parent=0 // pred_region
    %v633 = vld [vmem:[#allocation2] sm:$0xff]
    %v634 = vld [vmem:[#allocation2 + $0x8] sm:$0xff]
    %v635 = vld [vmem:[#allocation2 + $0x10] sm:$0xff]
    %v636 = vld [vmem:[#allocation2 + $0x18] sm:$0xff]
    %v637 = vld [vmem:[#allocation2 + $0x20] sm:$0xff]
    %v638 = vld [vmem:[#allocation2 + $0x28] sm:$0xff]
    %v639 = vld [vmem:[#allocation2 + $0x30] sm:$0xff]
    %v640 = vld [vmem:[#allocation2 + $0x38] sm:$0xff]
    %v641 = vld [vmem:[#allocation2 + $0x40] sm:$0xff]
    %v642 = vld [vmem:[#allocation2 + $0x48] sm:$0xff]
    %v643 = vld [vmem:[#allocation2 + $0x50] sm:$0xff]
    %v644 = vld [vmem:[#allocation2 + $0x58] sm:$0xff]
    %v645 = vld [vmem:[#allocation2 + $0x60] sm:$0xff]
    %v646 = vld [vmem:[#allocation2 + $0x68] sm:$0xff]
    %v647 = vld [vmem:[#allocation2 + $0x70] sm:$0xff]
    %v648 = vld [vmem:[#allocation2 + $0x78] sm:$0xff]
    %v649 = vld [vmem:[#allocation2 + $0x80] sm:$0xff]
    %v650 = vld [vmem:[#allocation2 + $0x88] sm:$0xff]
    %v651 = vld [vmem:[#allocation2 + $0x90] sm:$0xff]
    %v652 = vld [vmem:[#allocation2 + $0x98] sm:$0xff]
    %v653 = vld [vmem:[#allocation2 + $0xa0] sm:$0xff]
    %v654 = vld [vmem:[#allocation2 + $0xa8] sm:$0xff]
    %v655 = vld [vmem:[#allocation2 + $0xb0] sm:$0xff]
    %v656 = vld [vmem:[#allocation2 + $0xb8] sm:$0xff]
    %v657 = vld [vmem:[#allocation2 + $0xc0] sm:$0xff]
    %v658 = vld [vmem:[#allocation2 + $0xc8] sm:$0xff]
    %v659 = vld [vmem:[#allocation2 + $0xd0] sm:$0xff]
    %v660 = vld [vmem:[#allocation2 + $0xd8] sm:$0xff]
    %v661 = vld [vmem:[#allocation2 + $0xe0] sm:$0xff]
    %v662 = vld [vmem:[#allocation2 + $0xe8] sm:$0xff]
    %v663 = vld [vmem:[#allocation2 + $0xf0] sm:$0xff]
    %v664 = vld [vmem:[#allocation2 + $0xf8] sm:$0xff]
    %v665 = vpack.c.bf16 %v634, %v633
    %v666 = vpack.c.bf16 %v636, %v635
    %v667 = vpack.c.bf16 %v638, %v637
    %v668 = vpack.c.bf16 %v640, %v639
    %v669 = vpack.c.bf16 %v642, %v641
    %v670 = vpack.c.bf16 %v644, %v643
    %v671 = vpack.c.bf16 %v646, %v645
    %v672 = vpack.c.bf16 %v648, %v647
    %v673 = vpack.c.bf16 %v650, %v649
    %v674 = vpack.c.bf16 %v652, %v651
    %v675 = vpack.c.bf16 %v654, %v653
    %v676 = vpack.c.bf16 %v656, %v655
    %v677 = vpack.c.bf16 %v658, %v657
    %v678 = vpack.c.bf16 %v660, %v659
    %v679 = vpack.c.bf16 %v662, %v661
    %v680 = vpack.c.bf16 %v664, %v663
    %v697 = vunpack.c.l.b16 %v665
    %v698 = vunpack.c.h.b16 %v665
    %v699 = vunpack.c.l.b16 %v666
    %v700 = vunpack.c.h.b16 %v666
    %v701 = vunpack.c.l.b16 %v667
    %v702 = vunpack.c.h.b16 %v667
    %v703 = vunpack.c.l.b16 %v668
    %v704 = vunpack.c.h.b16 %v668
    %v705 = vunpack.c.l.b16 %v669
    %v706 = vunpack.c.h.b16 %v669
    %v707 = vunpack.c.l.b16 %v670
    %v708 = vunpack.c.h.b16 %v670
    %v709 = vunpack.c.l.b16 %v671
    %v710 = vunpack.c.h.b16 %v671
    %v711 = vunpack.c.l.b16 %v672
    %v712 = vunpack.c.h.b16 %v672
    %v713 = vunpack.c.l.b16 %v673
    %v714 = vunpack.c.h.b16 %v673
    %v715 = vunpack.c.l.b16 %v674
    %v716 = vunpack.c.h.b16 %v674
    %v717 = vunpack.c.l.b16 %v675
    %v718 = vunpack.c.h.b16 %v675
    %v719 = vunpack.c.l.b16 %v676
    %v720 = vunpack.c.h.b16 %v676
    %v721 = vunpack.c.l.b16 %v677
    %v722 = vunpack.c.h.b16 %v677
    %v723 = vunpack.c.l.b16 %v678
    %v724 = vunpack.c.h.b16 %v678
    %v725 = vunpack.c.l.b16 %v679
    %v726 = vunpack.c.h.b16 %v679
    %v727 = vunpack.c.l.b16 %v680
    %v728 = vunpack.c.h.b16 %v680
    %v729 = vpack.c.b16 %v697, %v697
    %v730 = vpack.c.b16 %v698, %v698
    %v731 = vpack.c.b16 %v699, %v699
    %v732 = vpack.c.b16 %v700, %v700
    %v733 = vpack.c.b16 %v701, %v701
    %v734 = vpack.c.b16 %v702, %v702
    %v735 = vpack.c.b16 %v703, %v703
    %v736 = vpack.c.b16 %v704, %v704
    %v737 = vpack.c.b16 %v705, %v705
    %v738 = vpack.c.b16 %v706, %v706
    %v739 = vpack.c.b16 %v707, %v707
    %v740 = vpack.c.b16 %v708, %v708
    %v741 = vpack.c.b16 %v709, %v709
    %v742 = vpack.c.b16 %v710, %v710
    %v743 = vpack.c.b16 %v711, %v711
    %v744 = vpack.c.b16 %v712, %v712
    %v745 = vpack.c.b16 %v713, %v713
    %v746 = vpack.c.b16 %v714, %v714
    %v747 = vpack.c.b16 %v715, %v715
    %v748 = vpack.c.b16 %v716, %v716
    %v749 = vpack.c.b16 %v717, %v717
    %v750 = vpack.c.b16 %v718, %v718
    %v751 = vpack.c.b16 %v719, %v719
    %v752 = vpack.c.b16 %v720, %v720
    %v753 = vpack.c.b16 %v721, %v721
    %v754 = vpack.c.b16 %v722, %v722
    %v755 = vpack.c.b16 %v723, %v723
    %v756 = vpack.c.b16 %v724, %v724
    %v757 = vpack.c.b16 %v725, %v725
    %v758 = vpack.c.b16 %v726, %v726
    %v759 = vpack.c.b16 %v727, %v727
    %v760 = vpack.c.b16 %v728, %v728
    %793 = vst [vmem:[%s2] sm:$0xf] %v729
    %794 = vst [vmem:[%s2 + $0x4] sm:$0xf] %v730
    %795 = vst [vmem:[%s2 + $0x8] sm:$0xf] %v731
    %796 = vst [vmem:[%s2 + $0xc] sm:$0xf] %v732
    %797 = vst [vmem:[%s2 + $0x10] sm:$0xf] %v733
    %798 = vst [vmem:[%s2 + $0x14] sm:$0xf] %v734
    %799 = vst [vmem:[%s2 + $0x18] sm:$0xf] %v735
    %800 = vst [vmem:[%s2 + $0x1c] sm:$0xf] %v736
    %801 = vst [vmem:[%s2 + $0x20] sm:$0xf] %v737
    %802 = vst [vmem:[%s2 + $0x24] sm:$0xf] %v738
    %803 = vst [vmem:[%s2 + $0x28] sm:$0xf] %v739
    %804 = vst [vmem:[%s2 + $0x2c] sm:$0xf] %v740
    %805 = vst [vmem:[%s2 + $0x30] sm:$0xf] %v741
    %806 = vst [vmem:[%s2 + $0x34] sm:$0xf] %v742
    %807 = vst [vmem:[%s2 + $0x38] sm:$0xf] %v743
    %808 = vst [vmem:[%s2 + $0x3c] sm:$0xf] %v744
    %809 = vst [vmem:[%s2 + $0x40] sm:$0xf] %v745
    %810 = vst [vmem:[%s2 + $0x44] sm:$0xf] %v746
    %811 = vst [vmem:[%s2 + $0x48] sm:$0xf] %v747
    %812 = vst [vmem:[%s2 + $0x4c] sm:$0xf] %v748
    %813 = vst [vmem:[%s2 + $0x50] sm:$0xf] %v749
    %814 = vst [vmem:[%s2 + $0x54] sm:$0xf] %v750
    %815 = vst [vmem:[%s2 + $0x58] sm:$0xf] %v751
    %816 = vst [vmem:[%s2 + $0x5c] sm:$0xf] %v752
    %817 = vst [vmem:[%s2 + $0x60] sm:$0xf] %v753
    %818 = vst [vmem:[%s2 + $0x64] sm:$0xf] %v754
    %819 = vst [vmem:[%s2 + $0x68] sm:$0xf] %v755
    %820 = vst [vmem:[%s2 + $0x6c] sm:$0xf] %v756
    %821 = vst [vmem:[%s2 + $0x70] sm:$0xf] %v757
    %822 = vst [vmem:[%s2 + $0x74] sm:$0xf] %v758
    %823 = vst [vmem:[%s2 + $0x78] sm:$0xf] %v759
    %824 = vst [vmem:[%s2 + $0x7c] sm:$0xf] %v760
  $region17: #{lightgcn_forward.2} parent=0 // pred_fallthru
    _
  // Predicated region
  $region18: #{lightgcn_forward.2} parent=0 // pred_check
    _
  $region19: #{lightgcn_forward.2} parent=0 // pred_check_branch
    %826 = sbr.rel (0) target = $region21
  $region20: #{lightgcn_forward.2} parent=0 // pred_region
    _
  $region21: #{lightgcn_forward.2} parent=0 // pred_fallthru
    _
  // Predicated region
  $region22: #{lightgcn_forward.2} parent=0 // pred_check
    _
  $region23: #{lightgcn_forward.2} parent=0 // pred_check_branch
    %828 = sbr.rel (0) target = $region25
  $region24: #{lightgcn_forward.2} parent=0 // pred_region
    _
  $region25: #{lightgcn_forward.2} parent=0 // pred_fallthru
    _

// kernel: lightgcn_forward.3
$region0: #{lightgcn_forward.3}
  #allocation0 [shape = 'u32[]', space=smem, size = 0x4, offset = 0x4, fixed_abs, tag = 'smem constant byte address 0x4 - core index']
  #allocation1 [shape = 'u32[144,128]{1,0:T(1,128)}', space=vmem, size = 0x12000, scoped, tag = 'internal scratch']
  #allocation2 [shape = 'f32[256,128]{1,0:T(8,128)}', space=vmem, size = 0x20000, scoped, tag = 'scratch operand']
  %s0 = inlined_call_operand.vmem [shape: bf16[256,256], index: 0, kind: input, shape index: {}]
  %s1 = inlined_call_operand.vmem [shape: bf16[256,128], index: 1, kind: input, shape index: {}]
  %s2 = inlined_call_operand.vmem [shape: bf16[128,128], index: 2, kind: input, shape index: {}]
  %s3 = inlined_call_operand.vmem [shape: f32[1,128], index: 3, kind: input, shape index: {}]
  %s4 = inlined_call_operand.vmem [shape: f32[256,128], index: 4, kind: output, shape index: {}]
  %s5 = sld [smem:[#allocation0]]
  $region34: #{lightgcn_forward.3} parent=0
    _
  %s7 = ssub.s32 1, %s5
  %s8 = scalar_select 0, %s7, %s5
  // Predicated region
  $region2: #{lightgcn_forward.3} parent=0 // pred_check
    _
  $region3: #{lightgcn_forward.3} parent=0 // pred_check_branch
    %10 = sbr.rel (0) target = $region5
  $region4: #{lightgcn_forward.3} parent=0 // pred_region
    _
  $region5: #{lightgcn_forward.3} parent=0 // pred_fallthru
    _
  // Predicated region
  $region6: #{lightgcn_forward.3} parent=0 // pred_check
    _
  $region7: #{lightgcn_forward.3} parent=0 // pred_check_branch
    %12 = sbr.rel (0) target = $region9
  $region8: #{lightgcn_forward.3} parent=0 // pred_region
    _
  $region9: #{lightgcn_forward.3} parent=0 // pred_fallthru
    _
  // Predicated region
  $region10: #{lightgcn_forward.3} parent=0 // pred_check
    _
  $region11: #{lightgcn_forward.3} parent=0 // pred_check_branch
    %14 = sbr.rel (0) target = $region13
  $region12: #{lightgcn_forward.3} parent=0 // pred_region
    _
  $region13: #{lightgcn_forward.3} parent=0 // pred_fallthru
    _
  // Predicated region
  $region14: #{lightgcn_forward.3} parent=0 // pred_check
    _
  $region15: #{lightgcn_forward.3} parent=0 // pred_check_branch
    %16 = sbr.rel (0) target = $region17
  $region16: #{lightgcn_forward.3} parent=0 // pred_region
    _
  $region17: #{lightgcn_forward.3} parent=0 // pred_fallthru
    _
  %p18 = scmp.eq.s32.totalorder 0, 0
  // Predicated region
  $region18: #{lightgcn_forward.3} parent=0 // pred_check
    %p19 = pneg %p18
  $region19: #{lightgcn_forward.3} parent=0 // pred_check_branch
    %21 = sbr.rel (%p19) target = $region21
  $region20: #{lightgcn_forward.3} parent=0 // pred_region
    %22 = vst [vmem:[#allocation2] sm:$0xff] 0.0
    %23 = vst [vmem:[#allocation2 + $0x8] sm:$0xff] 0.0
    %24 = vst [vmem:[#allocation2 + $0x10] sm:$0xff] 0.0
    %25 = vst [vmem:[#allocation2 + $0x18] sm:$0xff] 0.0
    %26 = vst [vmem:[#allocation2 + $0x20] sm:$0xff] 0.0
    %27 = vst [vmem:[#allocation2 + $0x28] sm:$0xff] 0.0
    %28 = vst [vmem:[#allocation2 + $0x30] sm:$0xff] 0.0
    %29 = vst [vmem:[#allocation2 + $0x38] sm:$0xff] 0.0
    %30 = vst [vmem:[#allocation2 + $0x40] sm:$0xff] 0.0
    %31 = vst [vmem:[#allocation2 + $0x48] sm:$0xff] 0.0
    %32 = vst [vmem:[#allocation2 + $0x50] sm:$0xff] 0.0
    %33 = vst [vmem:[#allocation2 + $0x58] sm:$0xff] 0.0
    %34 = vst [vmem:[#allocation2 + $0x60] sm:$0xff] 0.0
    %35 = vst [vmem:[#allocation2 + $0x68] sm:$0xff] 0.0
    %36 = vst [vmem:[#allocation2 + $0x70] sm:$0xff] 0.0
    %37 = vst [vmem:[#allocation2 + $0x78] sm:$0xff] 0.0
    %38 = vst [vmem:[#allocation2 + $0x80] sm:$0xff] 0.0
    %39 = vst [vmem:[#allocation2 + $0x88] sm:$0xff] 0.0
    %40 = vst [vmem:[#allocation2 + $0x90] sm:$0xff] 0.0
    %41 = vst [vmem:[#allocation2 + $0x98] sm:$0xff] 0.0
    %42 = vst [vmem:[#allocation2 + $0xa0] sm:$0xff] 0.0
    %43 = vst [vmem:[#allocation2 + $0xa8] sm:$0xff] 0.0
    %44 = vst [vmem:[#allocation2 + $0xb0] sm:$0xff] 0.0
    %45 = vst [vmem:[#allocation2 + $0xb8] sm:$0xff] 0.0
    %46 = vst [vmem:[#allocation2 + $0xc0] sm:$0xff] 0.0
    %47 = vst [vmem:[#allocation2 + $0xc8] sm:$0xff] 0.0
    %48 = vst [vmem:[#allocation2 + $0xd0] sm:$0xff] 0.0
    %49 = vst [vmem:[#allocation2 + $0xd8] sm:$0xff] 0.0
    %50 = vst [vmem:[#allocation2 + $0xe0] sm:$0xff] 0.0
    %51 = vst [vmem:[#allocation2 + $0xe8] sm:$0xff] 0.0
    %52 = vst [vmem:[#allocation2 + $0xf0] sm:$0xff] 0.0
    %53 = vst [vmem:[#allocation2 + $0xf8] sm:$0xff] 0.0
  $region21: #{lightgcn_forward.3} parent=0 // pred_fallthru
    _
  %s54 = smul.u32 0, 256
  %s55 = sshra.s32 %s54, 3
  %s56 = sand.u32 %s54, 7
  %s57 = smul.addr %s55, 4
  %s58 = scalar_lea.vmem %s1, %s57
  %v59 = vld [vmem:[%s58] sm:$0xf]
  %v60 = vld [vmem:[%s58 + $0x4] sm:$0xf]
  %v61 = vld [vmem:[%s58 + $0x8] sm:$0xf]
  %v62 = vld [vmem:[%s58 + $0xc] sm:$0xf]
  %v63 = vld [vmem:[%s58 + $0x10] sm:$0xf]
  %v64 = vld [vmem:[%s58 + $0x14] sm:$0xf]
  %v65 = vld [vmem:[%s58 + $0x18] sm:$0xf]
  %v66 = vld [vmem:[%s58 + $0x1c] sm:$0xf]
  %v67 = vld [vmem:[%s58 + $0x20] sm:$0xf]
  %v68 = vld [vmem:[%s58 + $0x24] sm:$0xf]
  %v69 = vld [vmem:[%s58 + $0x28] sm:$0xf]
  %v70 = vld [vmem:[%s58 + $0x2c] sm:$0xf]
  %v71 = vld [vmem:[%s58 + $0x30] sm:$0xf]
  %v72 = vld [vmem:[%s58 + $0x34] sm:$0xf]
  %v73 = vld [vmem:[%s58 + $0x38] sm:$0xf]
  %v74 = vld [vmem:[%s58 + $0x3c] sm:$0xf]
  %v75 = vld [vmem:[%s58 + $0x40] sm:$0xf]
  %v76 = vld [vmem:[%s58 + $0x44] sm:$0xf]
  %v77 = vld [vmem:[%s58 + $0x48] sm:$0xf]
  %v78 = vld [vmem:[%s58 + $0x4c] sm:$0xf]
  %v79 = vld [vmem:[%s58 + $0x50] sm:$0xf]
  %v80 = vld [vmem:[%s58 + $0x54] sm:$0xf]
  %v81 = vld [vmem:[%s58 + $0x58] sm:$0xf]
  %v82 = vld [vmem:[%s58 + $0x5c] sm:$0xf]
  %v83 = vld [vmem:[%s58 + $0x60] sm:$0xf]
  %v84 = vld [vmem:[%s58 + $0x64] sm:$0xf]
  %v85 = vld [vmem:[%s58 + $0x68] sm:$0xf]
  %v86 = vld [vmem:[%s58 + $0x6c] sm:$0xf]
  %v87 = vld [vmem:[%s58 + $0x70] sm:$0xf]
  %v88 = vld [vmem:[%s58 + $0x74] sm:$0xf]
  %v89 = vld [vmem:[%s58 + $0x78] sm:$0xf]
  %v90 = vld [vmem:[%s58 + $0x7c] sm:$0xf]
  %v91 = vld [vmem:[#allocation2] sm:$0xff]
  %v92 = vld [vmem:[#allocation2 + $0x8] sm:$0xff]
  %v93 = vld [vmem:[#allocation2 + $0x10] sm:$0xff]
  %v94 = vld [vmem:[#allocation2 + $0x18] sm:$0xff]
  %v95 = vld [vmem:[#allocation2 + $0x20] sm:$0xff]
  %v96 = vld [vmem:[#allocation2 + $0x28] sm:$0xff]
  %v97 = vld [vmem:[#allocation2 + $0x30] sm:$0xff]
  %v98 = vld [vmem:[#allocation2 + $0x38] sm:$0xff]
  %v99 = vld [vmem:[#allocation2 + $0x40] sm:$0xff]
  %v100 = vld [vmem:[#allocation2 + $0x48] sm:$0xff]
  %v101 = vld [vmem:[#allocation2 + $0x50] sm:$0xff]
  %v102 = vld [vmem:[#allocation2 + $0x58] sm:$0xff]
  %v103 = vld [vmem:[#allocation2 + $0x60] sm:$0xff]
  %v104 = vld [vmem:[#allocation2 + $0x68] sm:$0xff]
  %v105 = vld [vmem:[#allocation2 + $0x70] sm:$0xff]
  %v106 = vld [vmem:[#allocation2 + $0x78] sm:$0xff]
  %v107 = vld [vmem:[#allocation2 + $0x80] sm:$0xff]
  %v108 = vld [vmem:[#allocation2 + $0x88] sm:$0xff]
  %v109 = vld [vmem:[#allocation2 + $0x90] sm:$0xff]
  %v110 = vld [vmem:[#allocation2 + $0x98] sm:$0xff]
  %v111 = vld [vmem:[#allocation2 + $0xa0] sm:$0xff]
  %v112 = vld [vmem:[#allocation2 + $0xa8] sm:$0xff]
  %v113 = vld [vmem:[#allocation2 + $0xb0] sm:$0xff]
  %v114 = vld [vmem:[#allocation2 + $0xb8] sm:$0xff]
  %v115 = vld [vmem:[#allocation2 + $0xc0] sm:$0xff]
  %v116 = vld [vmem:[#allocation2 + $0xc8] sm:$0xff]
  %v117 = vld [vmem:[#allocation2 + $0xd0] sm:$0xff]
  %v118 = vld [vmem:[#allocation2 + $0xd8] sm:$0xff]
  %v119 = vld [vmem:[#allocation2 + $0xe0] sm:$0xff]
  %v120 = vld [vmem:[#allocation2 + $0xe8] sm:$0xff]
  %v121 = vld [vmem:[#allocation2 + $0xf0] sm:$0xff]
  %v122 = vld [vmem:[#allocation2 + $0xf8] sm:$0xff]
  %v123 = vld [vmem:[%s0] sm:$0xff]
  %v124 = vld [vmem:[%s0 + $0x8] sm:$0xff]
  %v125 = vld [vmem:[%s0 + $0x10] sm:$0xff]
  %v126 = vld [vmem:[%s0 + $0x18] sm:$0xff]
  %v127 = vld [vmem:[%s0 + $0x20] sm:$0xff]
  %v128 = vld [vmem:[%s0 + $0x28] sm:$0xff]
  %v129 = vld [vmem:[%s0 + $0x30] sm:$0xff]
  %v130 = vld [vmem:[%s0 + $0x38] sm:$0xff]
  %v131 = vld [vmem:[%s0 + $0x40] sm:$0xff]
  %v132 = vld [vmem:[%s0 + $0x48] sm:$0xff]
  %v133 = vld [vmem:[%s0 + $0x50] sm:$0xff]
  %v134 = vld [vmem:[%s0 + $0x58] sm:$0xff]
  %v135 = vld [vmem:[%s0 + $0x60] sm:$0xff]
  %v136 = vld [vmem:[%s0 + $0x68] sm:$0xff]
  %v137 = vld [vmem:[%s0 + $0x70] sm:$0xff]
  %v138 = vld [vmem:[%s0 + $0x78] sm:$0xff]
  %v139 = vld [vmem:[%s0 + $0x80] sm:$0xff]
  %v140 = vld [vmem:[%s0 + $0x88] sm:$0xff]
  %v141 = vld [vmem:[%s0 + $0x90] sm:$0xff]
  %v142 = vld [vmem:[%s0 + $0x98] sm:$0xff]
  %v143 = vld [vmem:[%s0 + $0xa0] sm:$0xff]
  %v144 = vld [vmem:[%s0 + $0xa8] sm:$0xff]
  %v145 = vld [vmem:[%s0 + $0xb0] sm:$0xff]
  %v146 = vld [vmem:[%s0 + $0xb8] sm:$0xff]
  %v147 = vld [vmem:[%s0 + $0xc0] sm:$0xff]
  %v148 = vld [vmem:[%s0 + $0xc8] sm:$0xff]
  %v149 = vld [vmem:[%s0 + $0xd0] sm:$0xff]
  %v150 = vld [vmem:[%s0 + $0xd8] sm:$0xff]
  %v151 = vld [vmem:[%s0 + $0xe0] sm:$0xff]
  %v152 = vld [vmem:[%s0 + $0xe8] sm:$0xff]
  %v153 = vld [vmem:[%s0 + $0xf0] sm:$0xff]
  %v154 = vld [vmem:[%s0 + $0xf8] sm:$0xff]
  %v187 = vunpack.c.l.b16 %v123
  %v188 = vunpack.c.h.b16 %v123
  %v189 = vunpack.c.l.b16 %v124
  %v190 = vunpack.c.h.b16 %v124
  %v191 = vunpack.c.l.b16 %v125
  %v192 = vunpack.c.h.b16 %v125
  %v193 = vunpack.c.l.b16 %v126
  %v194 = vunpack.c.h.b16 %v126
  %v195 = vunpack.c.l.b16 %v127
  %v196 = vunpack.c.h.b16 %v127
  %v197 = vunpack.c.l.b16 %v128
  %v198 = vunpack.c.h.b16 %v128
  %v199 = vunpack.c.l.b16 %v129
  %v200 = vunpack.c.h.b16 %v129
  %v201 = vunpack.c.l.b16 %v130
  %v202 = vunpack.c.h.b16 %v130
  %v203 = vunpack.c.l.b16 %v131
  %v204 = vunpack.c.h.b16 %v131
  %v205 = vunpack.c.l.b16 %v132
  %v206 = vunpack.c.h.b16 %v132
  %v207 = vunpack.c.l.b16 %v133
  %v208 = vunpack.c.h.b16 %v133
  %v209 = vunpack.c.l.b16 %v134
  %v210 = vunpack.c.h.b16 %v134
  %v211 = vunpack.c.l.b16 %v135
  %v212 = vunpack.c.h.b16 %v135
  %v213 = vunpack.c.l.b16 %v136
  %v214 = vunpack.c.h.b16 %v136
  %v215 = vunpack.c.l.b16 %v137
  %v216 = vunpack.c.h.b16 %v137
  %v217 = vunpack.c.l.b16 %v138
  %v218 = vunpack.c.h.b16 %v138
  %v219 = vunpack.c.l.b16 %v139
  %v220 = vunpack.c.h.b16 %v139
  %v221 = vunpack.c.l.b16 %v140
  %v222 = vunpack.c.h.b16 %v140
  %v223 = vunpack.c.l.b16 %v141
  %v224 = vunpack.c.h.b16 %v141
  %v225 = vunpack.c.l.b16 %v142
  %v226 = vunpack.c.h.b16 %v142
  %v227 = vunpack.c.l.b16 %v143
  %v228 = vunpack.c.h.b16 %v143
  %v229 = vunpack.c.l.b16 %v144
  %v230 = vunpack.c.h.b16 %v144
  %v231 = vunpack.c.l.b16 %v145
  %v232 = vunpack.c.h.b16 %v145
  %v233 = vunpack.c.l.b16 %v146
  %v234 = vunpack.c.h.b16 %v146
  %v235 = vunpack.c.l.b16 %v147
  %v236 = vunpack.c.h.b16 %v147
  %v237 = vunpack.c.l.b16 %v148
  %v238 = vunpack.c.h.b16 %v148
  %v239 = vunpack.c.l.b16 %v149
  %v240 = vunpack.c.h.b16 %v149
  %v241 = vunpack.c.l.b16 %v150
  %v242 = vunpack.c.h.b16 %v150
  %v243 = vunpack.c.l.b16 %v151
  %v244 = vunpack.c.h.b16 %v151
  %v245 = vunpack.c.l.b16 %v152
  %v246 = vunpack.c.h.b16 %v152
  %v247 = vunpack.c.l.b16 %v153
  %v248 = vunpack.c.h.b16 %v153
  %v249 = vunpack.c.l.b16 %v154
  %v250 = vunpack.c.h.b16 %v154
  %v251 = vpack.c.b16 %v189, %v187
  %v252 = vpack.c.b16 %v190, %v188
  %v253 = vpack.c.b16 %v193, %v191
  %v254 = vpack.c.b16 %v194, %v192
  %v255 = vpack.c.b16 %v197, %v195
  %v256 = vpack.c.b16 %v198, %v196
  %v257 = vpack.c.b16 %v201, %v199
  %v258 = vpack.c.b16 %v202, %v200
  %v259 = vpack.c.b16 %v205, %v203
  %v260 = vpack.c.b16 %v206, %v204
  %v261 = vpack.c.b16 %v209, %v207
  %v262 = vpack.c.b16 %v210, %v208
  %v263 = vpack.c.b16 %v213, %v211
  %v264 = vpack.c.b16 %v214, %v212
  %v265 = vpack.c.b16 %v217, %v215
  %v266 = vpack.c.b16 %v218, %v216
  %v267 = vpack.c.b16 %v221, %v219
  %v268 = vpack.c.b16 %v222, %v220
  %v269 = vpack.c.b16 %v225, %v223
  %v270 = vpack.c.b16 %v226, %v224
  %v271 = vpack.c.b16 %v229, %v227
  %v272 = vpack.c.b16 %v230, %v228
  %v273 = vpack.c.b16 %v233, %v231
  %v274 = vpack.c.b16 %v234, %v232
  %v275 = vpack.c.b16 %v237, %v235
  %v276 = vpack.c.b16 %v238, %v236
  %v277 = vpack.c.b16 %v241, %v239
  %v278 = vpack.c.b16 %v242, %v240
  %v279 = vpack.c.b16 %v245, %v243
  %v280 = vpack.c.b16 %v246, %v244
  %v281 = vpack.c.b16 %v249, %v247
  %v282 = vpack.c.b16 %v250, %v248
  %v347 = vunpack.c.l.b16 %v59
  %v348 = vunpack.c.l.b16 %v60
  %v349 = vunpack.c.l.b16 %v61
  %v350 = vunpack.c.l.b16 %v62
  %v351 = vunpack.c.l.b16 %v63
  %v352 = vunpack.c.l.b16 %v64
  %v353 = vunpack.c.l.b16 %v65
  %v354 = vunpack.c.l.b16 %v66
  %v355 = vunpack.c.l.b16 %v67
  %v356 = vunpack.c.l.b16 %v68
  %v357 = vunpack.c.l.b16 %v69
  %v358 = vunpack.c.l.b16 %v70
  %v359 = vunpack.c.l.b16 %v71
  %v360 = vunpack.c.l.b16 %v72
  %v361 = vunpack.c.l.b16 %v73
  %v362 = vunpack.c.l.b16 %v74
  %v363 = vunpack.c.l.b16 %v75
  %v364 = vunpack.c.l.b16 %v76
  %v365 = vunpack.c.l.b16 %v77
  %v366 = vunpack.c.l.b16 %v78
  %v367 = vunpack.c.l.b16 %v79
  %v368 = vunpack.c.l.b16 %v80
  %v369 = vunpack.c.l.b16 %v81
  %v370 = vunpack.c.l.b16 %v82
  %v371 = vunpack.c.l.b16 %v83
  %v372 = vunpack.c.l.b16 %v84
  %v373 = vunpack.c.l.b16 %v85
  %v374 = vunpack.c.l.b16 %v86
  %v375 = vunpack.c.l.b16 %v87
  %v376 = vunpack.c.l.b16 %v88
  %v377 = vunpack.c.l.b16 %v89
  %v378 = vunpack.c.l.b16 %v90
  %v379 = vpack.c.b16 %v348, %v347
  %v380 = vpack.c.b16 %v350, %v349
  %v381 = vpack.c.b16 %v352, %v351
  %v382 = vpack.c.b16 %v354, %v353
  %v383 = vpack.c.b16 %v356, %v355
  %v384 = vpack.c.b16 %v358, %v357
  %v385 = vpack.c.b16 %v360, %v359
  %v386 = vpack.c.b16 %v362, %v361
  %v387 = vpack.c.b16 %v364, %v363
  %v388 = vpack.c.b16 %v366, %v365
  %v389 = vpack.c.b16 %v368, %v367
  %v390 = vpack.c.b16 %v370, %v369
  %v391 = vpack.c.b16 %v372, %v371
  %v392 = vpack.c.b16 %v374, %v373
  %v393 = vpack.c.b16 %v376, %v375
  %v394 = vpack.c.b16 %v378, %v377
  %411 = vmatprep.subr.bf16.mxu0 0
  %412 = vmatpush1.bf16.msra.mxu0 %v379
  %413 = vmatprep.subr.bf16.mxu0 0
  %414 = vmatpush1.bf16.msra.mxu0 %v380
  %415 = vmatprep.subr.bf16.mxu0 0
  %416 = vmatpush1.bf16.msra.mxu0 %v381
  %417 = vmatprep.subr.bf16.mxu0 0
  %418 = vmatpush1.bf16.msra.mxu0 %v382
  %419 = vmatprep.subr.bf16.mxu0 0
  %420 = vmatpush1.bf16.msra.mxu0 %v383
  %421 = vmatprep.subr.bf16.mxu0 0
  %422 = vmatpush1.bf16.msra.mxu0 %v384
  %423 = vmatprep.subr.bf16.mxu0 0
  %424 = vmatpush1.bf16.msra.mxu0 %v385
  %425 = vmatprep.subr.bf16.mxu0 0
  %426 = vmatpush1.bf16.msra.mxu0 %v386
  %427 = vmatprep.subr.bf16.mxu0 0
  %428 = vmatpush1.bf16.msra.mxu0 %v387
  %429 = vmatprep.subr.bf16.mxu0 0
  %430 = vmatpush1.bf16.msra.mxu0 %v388
  %431 = vmatprep.subr.bf16.mxu0 0
  %432 = vmatpush1.bf16.msra.mxu0 %v389
  %433 = vmatprep.subr.bf16.mxu0 0
  %434 = vmatpush1.bf16.msra.mxu0 %v390
  %435 = vmatprep.subr.bf16.mxu0 0
  %436 = vmatpush1.bf16.msra.mxu0 %v391
  %437 = vmatprep.subr.bf16.mxu0 0
  %438 = vmatpush1.bf16.msra.mxu0 %v392
  %439 = vmatprep.subr.bf16.mxu0 0
  %440 = vmatpush1.bf16.msra.mxu0 %v393
  %441 = vmatprep.subr.bf16.mxu0 0
  %442 = vmatpush1.bf16.msra.mxu0 %v394
  %443 = vmatprep.mubr.bf16.mxu0 %v252
  %444 = vmatmul.mubr.bf16.gmra.mrb[0].mxu0 %v251
  %v445 = vpop.f32.mrb[0].mxu0
  %v446 = vadd.f32 0.0, %v445
  %v447 = vpop.f32.mrb[0].mxu0
  %v448 = vpop.f32.mrb[0].mxu0
  %v449 = vadd.f32 0.0, %v448
  %v450 = vpop.f32.mrb[0].mxu0
  %451 = vmatprep.mubr.bf16.mxu0 %v254
  %452 = vmatmul.mubr.bf16.gmra.mrb[0].mxu0 %v253
  %v453 = vpop.f32.mrb[0].mxu0
  %v454 = vadd.f32 0.0, %v453
  %v455 = vpop.f32.mrb[0].mxu0
  %v456 = vpop.f32.mrb[0].mxu0
  %v457 = vadd.f32 0.0, %v456
  %v458 = vpop.f32.mrb[0].mxu0
  %459 = vmatprep.mubr.bf16.mxu0 %v256
  %460 = vmatmul.mubr.bf16.gmra.mrb[0].mxu0 %v255
  %v461 = vpop.f32.mrb[0].mxu0
  %v462 = vadd.f32 0.0, %v461
  %v463 = vpop.f32.mrb[0].mxu0
  %v464 = vpop.f32.mrb[0].mxu0
  %v465 = vadd.f32 0.0, %v464
  %v466 = vpop.f32.mrb[0].mxu0
  %467 = vmatprep.mubr.bf16.mxu0 %v258
  %468 = vmatmul.mubr.bf16.gmra.mrb[0].mxu0 %v257
  %v469 = vpop.f32.mrb[0].mxu0
  %v470 = vadd.f32 0.0, %v469
  %v471 = vpop.f32.mrb[0].mxu0
  %v472 = vpop.f32.mrb[0].mxu0
  %v473 = vadd.f32 0.0, %v472
  %v474 = vpop.f32.mrb[0].mxu0
  %475 = vmatprep.mubr.bf16.mxu0 %v260
  %476 = vmatmul.mubr.bf16.gmra.mrb[0].mxu0 %v259
  %v477 = vpop.f32.mrb[0].mxu0
  %v478 = vadd.f32 0.0, %v477
  %v479 = vpop.f32.mrb[0].mxu0
  %v480 = vpop.f32.mrb[0].mxu0
  %v481 = vadd.f32 0.0, %v480
  %v482 = vpop.f32.mrb[0].mxu0
  %483 = vmatprep.mubr.bf16.mxu0 %v262
  %484 = vmatmul.mubr.bf16.gmra.mrb[0].mxu0 %v261
  %v485 = vpop.f32.mrb[0].mxu0
  %v486 = vadd.f32 0.0, %v485
  %v487 = vpop.f32.mrb[0].mxu0
  %v488 = vpop.f32.mrb[0].mxu0
  %v489 = vadd.f32 0.0, %v488
  %v490 = vpop.f32.mrb[0].mxu0
  %491 = vmatprep.mubr.bf16.mxu0 %v264
  %492 = vmatmul.mubr.bf16.gmra.mrb[0].mxu0 %v263
  %v493 = vpop.f32.mrb[0].mxu0
  %v494 = vadd.f32 0.0, %v493
  %v495 = vpop.f32.mrb[0].mxu0
  %v496 = vpop.f32.mrb[0].mxu0
  %v497 = vadd.f32 0.0, %v496
  %v498 = vpop.f32.mrb[0].mxu0
  %499 = vmatprep.mubr.bf16.mxu0 %v266
  %500 = vmatmul.mubr.bf16.gmra.mrb[0].mxu0 %v265
  %v501 = vpop.f32.mrb[0].mxu0
  %v502 = vadd.f32 0.0, %v501
  %v503 = vpop.f32.mrb[0].mxu0
  %v504 = vpop.f32.mrb[0].mxu0
  %v505 = vadd.f32 0.0, %v504
  %v506 = vpop.f32.mrb[0].mxu0
  %507 = vmatprep.mubr.bf16.mxu0 %v268
  %508 = vmatmul.mubr.bf16.gmra.mrb[0].mxu0 %v267
  %v509 = vpop.f32.mrb[0].mxu0
  %v510 = vadd.f32 0.0, %v509
  %v511 = vpop.f32.mrb[0].mxu0
  %v512 = vpop.f32.mrb[0].mxu0
  %v513 = vadd.f32 0.0, %v512
  %v514 = vpop.f32.mrb[0].mxu0
  %515 = vmatprep.mubr.bf16.mxu0 %v270
  %516 = vmatmul.mubr.bf16.gmra.mrb[0].mxu0 %v269
  %v517 = vpop.f32.mrb[0].mxu0
  %v518 = vadd.f32 0.0, %v517
  %v519 = vpop.f32.mrb[0].mxu0
  %v520 = vpop.f32.mrb[0].mxu0
  %v521 = vadd.f32 0.0, %v520
  %v522 = vpop.f32.mrb[0].mxu0
  %523 = vmatprep.mubr.bf16.mxu0 %v272
  %524 = vmatmul.mubr.bf16.gmra.mrb[0].mxu0 %v271
  %v525 = vpop.f32.mrb[0].mxu0
  %v526 = vadd.f32 0.0, %v525
  %v527 = vpop.f32.mrb[0].mxu0
  %v528 = vpop.f32.mrb[0].mxu0
  %v529 = vadd.f32 0.0, %v528
  %v530 = vpop.f32.mrb[0].mxu0
  %531 = vmatprep.mubr.bf16.mxu0 %v274
  %532 = vmatmul.mubr.bf16.gmra.mrb[0].mxu0 %v273
  %v533 = vpop.f32.mrb[0].mxu0
  %v534 = vadd.f32 0.0, %v533
  %v535 = vpop.f32.mrb[0].mxu0
  %v536 = vpop.f32.mrb[0].mxu0
  %v537 = vadd.f32 0.0, %v536
  %v538 = vpop.f32.mrb[0].mxu0
  %539 = vmatprep.mubr.bf16.mxu0 %v276
  %540 = vmatmul.mubr.bf16.gmra.mrb[0].mxu0 %v275
  %v541 = vpop.f32.mrb[0].mxu0
  %v542 = vadd.f32 0.0, %v541
  %v543 = vpop.f32.mrb[0].mxu0
  %v544 = vpop.f32.mrb[0].mxu0
  %v545 = vadd.f32 0.0, %v544
  %v546 = vpop.f32.mrb[0].mxu0
  %547 = vmatprep.mubr.bf16.mxu0 %v278
  %548 = vmatmul.mubr.bf16.gmra.mrb[0].mxu0 %v277
  %v549 = vpop.f32.mrb[0].mxu0
  %v550 = vadd.f32 0.0, %v549
  %v551 = vpop.f32.mrb[0].mxu0
  %v552 = vpop.f32.mrb[0].mxu0
  %v553 = vadd.f32 0.0, %v552
  %v554 = vpop.f32.mrb[0].mxu0
  %555 = vmatprep.mubr.bf16.mxu0 %v280
  %556 = vmatmul.mubr.bf16.gmra.mrb[0].mxu0 %v279
  %v557 = vpop.f32.mrb[0].mxu0
  %v558 = vadd.f32 0.0, %v557
  %v559 = vpop.f32.mrb[0].mxu0
  %v560 = vpop.f32.mrb[0].mxu0
  %v561 = vadd.f32 0.0, %v560
  %v562 = vpop.f32.mrb[0].mxu0
  %563 = vmatprep.mubr.bf16.mxu0 %v282
  %564 = vmatmul.mubr.bf16.gmra.mrb[0].mxu0 %v281
  %v565 = vpop.f32.mrb[0].mxu0
  %v566 = vadd.f32 0.0, %v565
  %v567 = vpop.f32.mrb[0].mxu0
  %v568 = vpop.f32.mrb[0].mxu0
  %v569 = vadd.f32 0.0, %v568
  %v570 = vpop.f32.mrb[0].mxu0
  %571 = vdwg.mxu0
  %v572 = vadd.f32 %v91, %v446
  %v573 = vadd.f32 %v92, %v449
  %v574 = vadd.f32 %v93, %v454
  %v575 = vadd.f32 %v94, %v457
  %v576 = vadd.f32 %v95, %v462
  %v577 = vadd.f32 %v96, %v465
  %v578 = vadd.f32 %v97, %v470
  %v579 = vadd.f32 %v98, %v473
  %v580 = vadd.f32 %v99, %v478
  %v581 = vadd.f32 %v100, %v481
  %v582 = vadd.f32 %v101, %v486
  %v583 = vadd.f32 %v102, %v489
  %v584 = vadd.f32 %v103, %v494
  %v585 = vadd.f32 %v104, %v497
  %v586 = vadd.f32 %v105, %v502
  %v587 = vadd.f32 %v106, %v505
  %v588 = vadd.f32 %v107, %v510
  %v589 = vadd.f32 %v108, %v513
  %v590 = vadd.f32 %v109, %v518
  %v591 = vadd.f32 %v110, %v521
  %v592 = vadd.f32 %v111, %v526
  %v593 = vadd.f32 %v112, %v529
  %v594 = vadd.f32 %v113, %v534
  %v595 = vadd.f32 %v114, %v537
  %v596 = vadd.f32 %v115, %v542
  %v597 = vadd.f32 %v116, %v545
  %v598 = vadd.f32 %v117, %v550
  %v599 = vadd.f32 %v118, %v553
  %v600 = vadd.f32 %v119, %v558
  %v601 = vadd.f32 %v120, %v561
  %v602 = vadd.f32 %v121, %v566
  %v603 = vadd.f32 %v122, %v569
  %604 = vst [vmem:[#allocation2] sm:$0xff] %v572
  %605 = vst [vmem:[#allocation2 + $0x8] sm:$0xff] %v573
  %606 = vst [vmem:[#allocation2 + $0x10] sm:$0xff] %v574
  %607 = vst [vmem:[#allocation2 + $0x18] sm:$0xff] %v575
  %608 = vst [vmem:[#allocation2 + $0x20] sm:$0xff] %v576
  %609 = vst [vmem:[#allocation2 + $0x28] sm:$0xff] %v577
  %610 = vst [vmem:[#allocation2 + $0x30] sm:$0xff] %v578
  %611 = vst [vmem:[#allocation2 + $0x38] sm:$0xff] %v579
  %612 = vst [vmem:[#allocation2 + $0x40] sm:$0xff] %v580
  %613 = vst [vmem:[#allocation2 + $0x48] sm:$0xff] %v581
  %614 = vst [vmem:[#allocation2 + $0x50] sm:$0xff] %v582
  %615 = vst [vmem:[#allocation2 + $0x58] sm:$0xff] %v583
  %616 = vst [vmem:[#allocation2 + $0x60] sm:$0xff] %v584
  %617 = vst [vmem:[#allocation2 + $0x68] sm:$0xff] %v585
  %618 = vst [vmem:[#allocation2 + $0x70] sm:$0xff] %v586
  %619 = vst [vmem:[#allocation2 + $0x78] sm:$0xff] %v587
  %620 = vst [vmem:[#allocation2 + $0x80] sm:$0xff] %v588
  %621 = vst [vmem:[#allocation2 + $0x88] sm:$0xff] %v589
  %622 = vst [vmem:[#allocation2 + $0x90] sm:$0xff] %v590
  %623 = vst [vmem:[#allocation2 + $0x98] sm:$0xff] %v591
  %624 = vst [vmem:[#allocation2 + $0xa0] sm:$0xff] %v592
  %625 = vst [vmem:[#allocation2 + $0xa8] sm:$0xff] %v593
  %626 = vst [vmem:[#allocation2 + $0xb0] sm:$0xff] %v594
  %627 = vst [vmem:[#allocation2 + $0xb8] sm:$0xff] %v595
  %628 = vst [vmem:[#allocation2 + $0xc0] sm:$0xff] %v596
  %629 = vst [vmem:[#allocation2 + $0xc8] sm:$0xff] %v597
  %630 = vst [vmem:[#allocation2 + $0xd0] sm:$0xff] %v598
  %631 = vst [vmem:[#allocation2 + $0xd8] sm:$0xff] %v599
  %632 = vst [vmem:[#allocation2 + $0xe0] sm:$0xff] %v600
  %633 = vst [vmem:[#allocation2 + $0xe8] sm:$0xff] %v601
  %634 = vst [vmem:[#allocation2 + $0xf0] sm:$0xff] %v602
  %635 = vst [vmem:[#allocation2 + $0xf8] sm:$0xff] %v603
  // Predicated region
  $region22: #{lightgcn_forward.3} parent=0 // pred_check
    %p636 = pneg %p18
  $region23: #{lightgcn_forward.3} parent=0 // pred_check_branch
    %638 = sbr.rel (%p636) target = $region25
  $region24: #{lightgcn_forward.3} parent=0 // pred_region
    %v639 = vld [vmem:[#allocation2] sm:$0xff]
    %v640 = vld [vmem:[#allocation2 + $0x8] sm:$0xff]
    %v641 = vld [vmem:[#allocation2 + $0x10] sm:$0xff]
    %v642 = vld [vmem:[#allocation2 + $0x18] sm:$0xff]
    %v643 = vld [vmem:[#allocation2 + $0x20] sm:$0xff]
    %v644 = vld [vmem:[#allocation2 + $0x28] sm:$0xff]
    %v645 = vld [vmem:[#allocation2 + $0x30] sm:$0xff]
    %v646 = vld [vmem:[#allocation2 + $0x38] sm:$0xff]
    %v647 = vld [vmem:[#allocation2 + $0x40] sm:$0xff]
    %v648 = vld [vmem:[#allocation2 + $0x48] sm:$0xff]
    %v649 = vld [vmem:[#allocation2 + $0x50] sm:$0xff]
    %v650 = vld [vmem:[#allocation2 + $0x58] sm:$0xff]
    %v651 = vld [vmem:[#allocation2 + $0x60] sm:$0xff]
    %v652 = vld [vmem:[#allocation2 + $0x68] sm:$0xff]
    %v653 = vld [vmem:[#allocation2 + $0x70] sm:$0xff]
    %v654 = vld [vmem:[#allocation2 + $0x78] sm:$0xff]
    %v655 = vld [vmem:[#allocation2 + $0x80] sm:$0xff]
    %v656 = vld [vmem:[#allocation2 + $0x88] sm:$0xff]
    %v657 = vld [vmem:[#allocation2 + $0x90] sm:$0xff]
    %v658 = vld [vmem:[#allocation2 + $0x98] sm:$0xff]
    %v659 = vld [vmem:[#allocation2 + $0xa0] sm:$0xff]
    %v660 = vld [vmem:[#allocation2 + $0xa8] sm:$0xff]
    %v661 = vld [vmem:[#allocation2 + $0xb0] sm:$0xff]
    %v662 = vld [vmem:[#allocation2 + $0xb8] sm:$0xff]
    %v663 = vld [vmem:[#allocation2 + $0xc0] sm:$0xff]
    %v664 = vld [vmem:[#allocation2 + $0xc8] sm:$0xff]
    %v665 = vld [vmem:[#allocation2 + $0xd0] sm:$0xff]
    %v666 = vld [vmem:[#allocation2 + $0xd8] sm:$0xff]
    %v667 = vld [vmem:[#allocation2 + $0xe0] sm:$0xff]
    %v668 = vld [vmem:[#allocation2 + $0xe8] sm:$0xff]
    %v669 = vld [vmem:[#allocation2 + $0xf0] sm:$0xff]
    %v670 = vld [vmem:[#allocation2 + $0xf8] sm:$0xff]
    %v671 = vpack.c.bf16 %v640, %v639
    %v672 = vpack.c.bf16 %v642, %v641
    %v673 = vpack.c.bf16 %v644, %v643
    %v674 = vpack.c.bf16 %v646, %v645
    %v675 = vpack.c.bf16 %v648, %v647
    %v676 = vpack.c.bf16 %v650, %v649
    %v677 = vpack.c.bf16 %v652, %v651
    %v678 = vpack.c.bf16 %v654, %v653
    %v679 = vpack.c.bf16 %v656, %v655
    %v680 = vpack.c.bf16 %v658, %v657
    %v681 = vpack.c.bf16 %v660, %v659
    %v682 = vpack.c.bf16 %v662, %v661
    %v683 = vpack.c.bf16 %v664, %v663
    %v684 = vpack.c.bf16 %v666, %v665
    %v685 = vpack.c.bf16 %v668, %v667
    %v686 = vpack.c.bf16 %v670, %v669
    %v687 = vld [vmem:[%s2] sm:$0xf]
    %v688 = vld [vmem:[%s2 + $0x4] sm:$0xf]
    %v689 = vld [vmem:[%s2 + $0x8] sm:$0xf]
    %v690 = vld [vmem:[%s2 + $0xc] sm:$0xf]
    %v691 = vld [vmem:[%s2 + $0x10] sm:$0xf]
    %v692 = vld [vmem:[%s2 + $0x14] sm:$0xf]
    %v693 = vld [vmem:[%s2 + $0x18] sm:$0xf]
    %v694 = vld [vmem:[%s2 + $0x1c] sm:$0xf]
    %v695 = vld [vmem:[%s2 + $0x20] sm:$0xf]
    %v696 = vld [vmem:[%s2 + $0x24] sm:$0xf]
    %v697 = vld [vmem:[%s2 + $0x28] sm:$0xf]
    %v698 = vld [vmem:[%s2 + $0x2c] sm:$0xf]
    %v699 = vld [vmem:[%s2 + $0x30] sm:$0xf]
    %v700 = vld [vmem:[%s2 + $0x34] sm:$0xf]
    %v701 = vld [vmem:[%s2 + $0x38] sm:$0xf]
    %v702 = vld [vmem:[%s2 + $0x3c] sm:$0xf]
    %v703 = vld [vmem:[%s3] sm:$0x1]
    %v705 = vlaneseq
    %v706 = vshrl.u32 %v705, 7
    %v707 = vsub.s32 0, %v706
    %v708 = vrot.slane %v703, %v707
    %v726 = vunpack.c.l.b16 %v687
    %v727 = vunpack.c.l.b16 %v688
    %v728 = vunpack.c.l.b16 %v689
    %v729 = vunpack.c.l.b16 %v690
    %v730 = vunpack.c.l.b16 %v691
    %v731 = vunpack.c.l.b16 %v692
    %v732 = vunpack.c.l.b16 %v693
    %v733 = vunpack.c.l.b16 %v694
    %v734 = vunpack.c.l.b16 %v695
    %v735 = vunpack.c.l.b16 %v696
    %v736 = vunpack.c.l.b16 %v697
    %v737 = vunpack.c.l.b16 %v698
    %v738 = vunpack.c.l.b16 %v699
    %v739 = vunpack.c.l.b16 %v700
    %v740 = vunpack.c.l.b16 %v701
    %v741 = vunpack.c.l.b16 %v702
    %v742 = vpack.c.b16 %v727, %v726
    %v743 = vpack.c.b16 %v729, %v728
    %v744 = vpack.c.b16 %v731, %v730
    %v745 = vpack.c.b16 %v733, %v732
    %v746 = vpack.c.b16 %v735, %v734
    %v747 = vpack.c.b16 %v737, %v736
    %v748 = vpack.c.b16 %v739, %v738
    %v749 = vpack.c.b16 %v741, %v740
    %758 = vmatprep.subr.bf16.mxu0 0
    %759 = vmatpush1.bf16.msra.mxu0 %v742
    %760 = vmatprep.subr.bf16.mxu0 0
    %761 = vmatpush1.bf16.msra.mxu0 %v743
    %762 = vmatprep.subr.bf16.mxu0 0
    %763 = vmatpush1.bf16.msra.mxu0 %v744
    %764 = vmatprep.subr.bf16.mxu0 0
    %765 = vmatpush1.bf16.msra.mxu0 %v745
    %766 = vmatprep.subr.bf16.mxu0 0
    %767 = vmatpush1.bf16.msra.mxu0 %v746
    %768 = vmatprep.subr.bf16.mxu0 0
    %769 = vmatpush1.bf16.msra.mxu0 %v747
    %770 = vmatprep.subr.bf16.mxu0 0
    %771 = vmatpush1.bf16.msra.mxu0 %v748
    %772 = vmatprep.subr.bf16.mxu0 0
    %773 = vmatpush1.bf16.msra.mxu0 %v749
    %774 = vmatprep.subr.bf16.mxu0 0
    %775 = vmatpush1.bf16.msra.mxu0 0
    %776 = vmatprep.subr.bf16.mxu0 0
    %777 = vmatpush1.bf16.msra.mxu0 0
    %778 = vmatprep.subr.bf16.mxu0 0
    %779 = vmatpush1.bf16.msra.mxu0 0
    %780 = vmatprep.subr.bf16.mxu0 0
    %781 = vmatpush1.bf16.msra.mxu0 0
    %782 = vmatprep.subr.bf16.mxu0 0
    %783 = vmatpush1.bf16.msra.mxu0 0
    %784 = vmatprep.subr.bf16.mxu0 0
    %785 = vmatpush1.bf16.msra.mxu0 0
    %786 = vmatprep.subr.bf16.mxu0 0
    %787 = vmatpush1.bf16.msra.mxu0 0
    %788 = vmatprep.subr.bf16.mxu0 0
    %789 = vmatpush1.bf16.msra.mxu0 0
    %790 = vmatprep.mubr.bf16.mxu0 0
    %791 = vmatmul.mubr.bf16.gmra.mrb[0].mxu0 %v671
    %v792 = vpop.f32.mrb[0].mxu0
    %v793 = vadd.f32 %v708, %v792
    %v794 = vpop.f32.mrb[0].mxu0
    %v795 = vpop.f32.mrb[0].mxu0
    %v796 = vadd.f32 %v708, %v795
    %v797 = vpop.f32.mrb[0].mxu0
    %798 = vmatprep.mubr.bf16.mxu0 0
    %799 = vmatmul.mubr.bf16.gmra.mrb[0].mxu0 %v672
    %v800 = vpop.f32.mrb[0].mxu0
    %v801 = vadd.f32 %v708, %v800
    %v802 = vpop.f32.mrb[0].mxu0
    %v803 = vpop.f32.mrb[0].mxu0
    %v804 = vadd.f32 %v708, %v803
    %v805 = vpop.f32.mrb[0].mxu0
    %806 = vmatprep.mubr.bf16.mxu0 0
    %807 = vmatmul.mubr.bf16.gmra.mrb[0].mxu0 %v673
    %v808 = vpop.f32.mrb[0].mxu0
    %v809 = vadd.f32 %v708, %v808
    %v810 = vpop.f32.mrb[0].mxu0
    %v811 = vpop.f32.mrb[0].mxu0
    %v812 = vadd.f32 %v708, %v811
    %v813 = vpop.f32.mrb[0].mxu0
    %814 = vmatprep.mubr.bf16.mxu0 0
    %815 = vmatmul.mubr.bf16.gmra.mrb[0].mxu0 %v674
    %v816 = vpop.f32.mrb[0].mxu0
    %v817 = vadd.f32 %v708, %v816
    %v818 = vpop.f32.mrb[0].mxu0
    %v819 = vpop.f32.mrb[0].mxu0
    %v820 = vadd.f32 %v708, %v819
    %v821 = vpop.f32.mrb[0].mxu0
    %822 = vmatprep.mubr.bf16.mxu0 0
    %823 = vmatmul.mubr.bf16.gmra.mrb[0].mxu0 %v675
    %v824 = vpop.f32.mrb[0].mxu0
    %v825 = vadd.f32 %v708, %v824
    %v826 = vpop.f32.mrb[0].mxu0
    %v827 = vpop.f32.mrb[0].mxu0
    %v828 = vadd.f32 %v708, %v827
    %v829 = vpop.f32.mrb[0].mxu0
    %830 = vmatprep.mubr.bf16.mxu0 0
    %831 = vmatmul.mubr.bf16.gmra.mrb[0].mxu0 %v676
    %v832 = vpop.f32.mrb[0].mxu0
    %v833 = vadd.f32 %v708, %v832
    %v834 = vpop.f32.mrb[0].mxu0
    %v835 = vpop.f32.mrb[0].mxu0
    %v836 = vadd.f32 %v708, %v835
    %v837 = vpop.f32.mrb[0].mxu0
    %838 = vmatprep.mubr.bf16.mxu0 0
    %839 = vmatmul.mubr.bf16.gmra.mrb[0].mxu0 %v677
    %v840 = vpop.f32.mrb[0].mxu0
    %v841 = vadd.f32 %v708, %v840
    %v842 = vpop.f32.mrb[0].mxu0
    %v843 = vpop.f32.mrb[0].mxu0
    %v844 = vadd.f32 %v708, %v843
    %v845 = vpop.f32.mrb[0].mxu0
    %846 = vmatprep.mubr.bf16.mxu0 0
    %847 = vmatmul.mubr.bf16.gmra.mrb[0].mxu0 %v678
    %v848 = vpop.f32.mrb[0].mxu0
    %v849 = vadd.f32 %v708, %v848
    %v850 = vpop.f32.mrb[0].mxu0
    %v851 = vpop.f32.mrb[0].mxu0
    %v852 = vadd.f32 %v708, %v851
    %v853 = vpop.f32.mrb[0].mxu0
    %854 = vmatprep.mubr.bf16.mxu0 0
    %855 = vmatmul.mubr.bf16.gmra.mrb[0].mxu0 %v679
    %v856 = vpop.f32.mrb[0].mxu0
    %v857 = vadd.f32 %v708, %v856
    %v858 = vpop.f32.mrb[0].mxu0
    %v859 = vpop.f32.mrb[0].mxu0
    %v860 = vadd.f32 %v708, %v859
    %v861 = vpop.f32.mrb[0].mxu0
    %862 = vmatprep.mubr.bf16.mxu0 0
    %863 = vmatmul.mubr.bf16.gmra.mrb[0].mxu0 %v680
    %v864 = vpop.f32.mrb[0].mxu0
    %v865 = vadd.f32 %v708, %v864
    %v866 = vpop.f32.mrb[0].mxu0
    %v867 = vpop.f32.mrb[0].mxu0
    %v868 = vadd.f32 %v708, %v867
    %v869 = vpop.f32.mrb[0].mxu0
    %870 = vmatprep.mubr.bf16.mxu0 0
    %871 = vmatmul.mubr.bf16.gmra.mrb[0].mxu0 %v681
    %v872 = vpop.f32.mrb[0].mxu0
    %v873 = vadd.f32 %v708, %v872
    %v874 = vpop.f32.mrb[0].mxu0
    %v875 = vpop.f32.mrb[0].mxu0
    %v876 = vadd.f32 %v708, %v875
    %v877 = vpop.f32.mrb[0].mxu0
    %878 = vmatprep.mubr.bf16.mxu0 0
    %879 = vmatmul.mubr.bf16.gmra.mrb[0].mxu0 %v682
    %v880 = vpop.f32.mrb[0].mxu0
    %v881 = vadd.f32 %v708, %v880
    %v882 = vpop.f32.mrb[0].mxu0
    %v883 = vpop.f32.mrb[0].mxu0
    %v884 = vadd.f32 %v708, %v883
    %v885 = vpop.f32.mrb[0].mxu0
    %886 = vmatprep.mubr.bf16.mxu0 0
    %887 = vmatmul.mubr.bf16.gmra.mrb[0].mxu0 %v683
    %v888 = vpop.f32.mrb[0].mxu0
    %v889 = vadd.f32 %v708, %v888
    %v890 = vpop.f32.mrb[0].mxu0
    %v891 = vpop.f32.mrb[0].mxu0
    %v892 = vadd.f32 %v708, %v891
    %v893 = vpop.f32.mrb[0].mxu0
    %894 = vmatprep.mubr.bf16.mxu0 0
    %895 = vmatmul.mubr.bf16.gmra.mrb[0].mxu0 %v684
    %v896 = vpop.f32.mrb[0].mxu0
    %v897 = vadd.f32 %v708, %v896
    %v898 = vpop.f32.mrb[0].mxu0
    %v899 = vpop.f32.mrb[0].mxu0
    %v900 = vadd.f32 %v708, %v899
    %v901 = vpop.f32.mrb[0].mxu0
    %902 = vmatprep.mubr.bf16.mxu0 0
    %903 = vmatmul.mubr.bf16.gmra.mrb[0].mxu0 %v685
    %v904 = vpop.f32.mrb[0].mxu0
    %v905 = vadd.f32 %v708, %v904
    %v906 = vpop.f32.mrb[0].mxu0
    %v907 = vpop.f32.mrb[0].mxu0
    %v908 = vadd.f32 %v708, %v907
    %v909 = vpop.f32.mrb[0].mxu0
    %910 = vmatprep.mubr.bf16.mxu0 0
    %911 = vmatmul.mubr.bf16.gmra.mrb[0].mxu0 %v686
    %v912 = vpop.f32.mrb[0].mxu0
    %v913 = vadd.f32 %v708, %v912
    %v914 = vpop.f32.mrb[0].mxu0
    %v915 = vpop.f32.mrb[0].mxu0
    %v916 = vadd.f32 %v708, %v915
    %v917 = vpop.f32.mrb[0].mxu0
    %918 = vdwg.mxu0
    %919 = vmax.xlane.f32.xlu0 %v793
    %v920 = vpop.xlane.xlu0 %919
    %921 = vmax.xlane.f32.xlu0 %v796
    %v922 = vpop.xlane.xlu0 %921
    %923 = vmax.xlane.f32.xlu0 %v801
    %v924 = vpop.xlane.xlu0 %923
    %925 = vmax.xlane.f32.xlu0 %v804
    %v926 = vpop.xlane.xlu0 %925
    %927 = vmax.xlane.f32.xlu0 %v809
    %v928 = vpop.xlane.xlu0 %927
    %929 = vmax.xlane.f32.xlu0 %v812
    %v930 = vpop.xlane.xlu0 %929
    %931 = vmax.xlane.f32.xlu0 %v817
    %v932 = vpop.xlane.xlu0 %931
    %933 = vmax.xlane.f32.xlu0 %v820
    %v934 = vpop.xlane.xlu0 %933
    %935 = vmax.xlane.f32.xlu0 %v825
    %v936 = vpop.xlane.xlu0 %935
    %937 = vmax.xlane.f32.xlu0 %v828
    %v938 = vpop.xlane.xlu0 %937
    %939 = vmax.xlane.f32.xlu0 %v833
    %v940 = vpop.xlane.xlu0 %939
    %941 = vmax.xlane.f32.xlu0 %v836
    %v942 = vpop.xlane.xlu0 %941
    %943 = vmax.xlane.f32.xlu0 %v841
    %v944 = vpop.xlane.xlu0 %943
    %945 = vmax.xlane.f32.xlu0 %v844
    %v946 = vpop.xlane.xlu0 %945
    %947 = vmax.xlane.f32.xlu0 %v849
    %v948 = vpop.xlane.xlu0 %947
    %949 = vmax.xlane.f32.xlu0 %v852
    %v950 = vpop.xlane.xlu0 %949
    %951 = vmax.xlane.f32.xlu0 %v857
    %v952 = vpop.xlane.xlu0 %951
    %953 = vmax.xlane.f32.xlu0 %v860
    %v954 = vpop.xlane.xlu0 %953
    %955 = vmax.xlane.f32.xlu0 %v865
    %v956 = vpop.xlane.xlu0 %955
    %957 = vmax.xlane.f32.xlu0 %v868
    %v958 = vpop.xlane.xlu0 %957
    %959 = vmax.xlane.f32.xlu0 %v873
    %v960 = vpop.xlane.xlu0 %959
    %961 = vmax.xlane.f32.xlu0 %v876
    %v962 = vpop.xlane.xlu0 %961
    %963 = vmax.xlane.f32.xlu0 %v881
    %v964 = vpop.xlane.xlu0 %963
    %965 = vmax.xlane.f32.xlu0 %v884
    %v966 = vpop.xlane.xlu0 %965
    %967 = vmax.xlane.f32.xlu0 %v889
    %v968 = vpop.xlane.xlu0 %967
    %969 = vmax.xlane.f32.xlu0 %v892
    %v970 = vpop.xlane.xlu0 %969
    %971 = vmax.xlane.f32.xlu0 %v897
    %v972 = vpop.xlane.xlu0 %971
    %973 = vmax.xlane.f32.xlu0 %v900
    %v974 = vpop.xlane.xlu0 %973
    %975 = vmax.xlane.f32.xlu0 %v905
    %v976 = vpop.xlane.xlu0 %975
    %977 = vmax.xlane.f32.xlu0 %v908
    %v978 = vpop.xlane.xlu0 %977
    %979 = vmax.xlane.f32.xlu0 %v913
    %v980 = vpop.xlane.xlu0 %979
    %981 = vmax.xlane.f32.xlu0 %v916
    %v982 = vpop.xlane.xlu0 %981
    %v983 = vsub.f32 %v793, %v920
    %v984 = vsub.f32 %v796, %v922
    %v985 = vsub.f32 %v801, %v924
    %v986 = vsub.f32 %v804, %v926
    %v987 = vsub.f32 %v809, %v928
    %v988 = vsub.f32 %v812, %v930
    %v989 = vsub.f32 %v817, %v932
    %v990 = vsub.f32 %v820, %v934
    %v991 = vsub.f32 %v825, %v936
    %v992 = vsub.f32 %v828, %v938
    %v993 = vsub.f32 %v833, %v940
    %v994 = vsub.f32 %v836, %v942
    %v995 = vsub.f32 %v841, %v944
    %v996 = vsub.f32 %v844, %v946
    %v997 = vsub.f32 %v849, %v948
    %v998 = vsub.f32 %v852, %v950
    %v999 = vsub.f32 %v857, %v952
    %v1000 = vsub.f32 %v860, %v954
    %v1001 = vsub.f32 %v865, %v956
    %v1002 = vsub.f32 %v868, %v958
    %v1003 = vsub.f32 %v873, %v960
    %v1004 = vsub.f32 %v876, %v962
    %v1005 = vsub.f32 %v881, %v964
    %v1006 = vsub.f32 %v884, %v966
    %v1007 = vsub.f32 %v889, %v968
    %v1008 = vsub.f32 %v892, %v970
    %v1009 = vsub.f32 %v897, %v972
    %v1010 = vsub.f32 %v900, %v974
    %v1011 = vsub.f32 %v905, %v976
    %v1012 = vsub.f32 %v908, %v978
    %v1013 = vsub.f32 %v913, %v980
    %v1014 = vsub.f32 %v916, %v982
    %v1015 = vmul.f32 %v983, 1.442695
    %v1016 = vpow.pop %v1015
    %v1017 = vmul.f32 %v984, 1.442695
    %v1018 = vpow.pop %v1017
    %v1019 = vmul.f32 %v985, 1.442695
    %v1020 = vpow.pop %v1019
    %v1021 = vmul.f32 %v986, 1.442695
    %v1022 = vpow.pop %v1021
    %v1023 = vmul.f32 %v987, 1.442695
    %v1024 = vpow.pop %v1023
    %v1025 = vmul.f32 %v988, 1.442695
    %v1026 = vpow.pop %v1025
    %v1027 = vmul.f32 %v989, 1.442695
    %v1028 = vpow.pop %v1027
    %v1029 = vmul.f32 %v990, 1.442695
    %v1030 = vpow.pop %v1029
    %v1031 = vmul.f32 %v991, 1.442695
    %v1032 = vpow.pop %v1031
    %v1033 = vmul.f32 %v992, 1.442695
    %v1034 = vpow.pop %v1033
    %v1035 = vmul.f32 %v993, 1.442695
    %v1036 = vpow.pop %v1035
    %v1037 = vmul.f32 %v994, 1.442695
    %v1038 = vpow.pop %v1037
    %v1039 = vmul.f32 %v995, 1.442695
    %v1040 = vpow.pop %v1039
    %v1041 = vmul.f32 %v996, 1.442695
    %v1042 = vpow.pop %v1041
    %v1043 = vmul.f32 %v997, 1.442695
    %v1044 = vpow.pop %v1043
    %v1045 = vmul.f32 %v998, 1.442695
    %v1046 = vpow.pop %v1045
    %v1047 = vmul.f32 %v999, 1.442695
    %v1048 = vpow.pop %v1047
    %v1049 = vmul.f32 %v1000, 1.442695
    %v1050 = vpow.pop %v1049
    %v1051 = vmul.f32 %v1001, 1.442695
    %v1052 = vpow.pop %v1051
    %v1053 = vmul.f32 %v1002, 1.442695
    %v1054 = vpow.pop %v1053
    %v1055 = vmul.f32 %v1003, 1.442695
    %v1056 = vpow.pop %v1055
    %v1057 = vmul.f32 %v1004, 1.442695
    %v1058 = vpow.pop %v1057
    %v1059 = vmul.f32 %v1005, 1.442695
    %v1060 = vpow.pop %v1059
    %v1061 = vmul.f32 %v1006, 1.442695
    %v1062 = vpow.pop %v1061
    %v1063 = vmul.f32 %v1007, 1.442695
    %v1064 = vpow.pop %v1063
    %v1065 = vmul.f32 %v1008, 1.442695
    %v1066 = vpow.pop %v1065
    %v1067 = vmul.f32 %v1009, 1.442695
    %v1068 = vpow.pop %v1067
    %v1069 = vmul.f32 %v1010, 1.442695
    %v1070 = vpow.pop %v1069
    %v1071 = vmul.f32 %v1011, 1.442695
    %v1072 = vpow.pop %v1071
    %v1073 = vmul.f32 %v1012, 1.442695
    %v1074 = vpow.pop %v1073
    %v1075 = vmul.f32 %v1013, 1.442695
    %v1076 = vpow.pop %v1075
    %v1077 = vmul.f32 %v1014, 1.442695
    %v1078 = vpow.pop %v1077
    %1079 = vadd.xlane.f32.xlu0 %v1016
    %v1080 = vpop.xlane.xlu0 %1079
    %1081 = vadd.xlane.f32.xlu0 %v1018
    %v1082 = vpop.xlane.xlu0 %1081
    %1083 = vadd.xlane.f32.xlu0 %v1020
    %v1084 = vpop.xlane.xlu0 %1083
    %1085 = vadd.xlane.f32.xlu0 %v1022
    %v1086 = vpop.xlane.xlu0 %1085
    %1087 = vadd.xlane.f32.xlu0 %v1024
    %v1088 = vpop.xlane.xlu0 %1087
    %1089 = vadd.xlane.f32.xlu0 %v1026
    %v1090 = vpop.xlane.xlu0 %1089
    %1091 = vadd.xlane.f32.xlu0 %v1028
    %v1092 = vpop.xlane.xlu0 %1091
    %1093 = vadd.xlane.f32.xlu0 %v1030
    %v1094 = vpop.xlane.xlu0 %1093
    %1095 = vadd.xlane.f32.xlu0 %v1032
    %v1096 = vpop.xlane.xlu0 %1095
    %1097 = vadd.xlane.f32.xlu0 %v1034
    %v1098 = vpop.xlane.xlu0 %1097
    %1099 = vadd.xlane.f32.xlu0 %v1036
    %v1100 = vpop.xlane.xlu0 %1099
    %1101 = vadd.xlane.f32.xlu0 %v1038
    %v1102 = vpop.xlane.xlu0 %1101
    %1103 = vadd.xlane.f32.xlu0 %v1040
    %v1104 = vpop.xlane.xlu0 %1103
    %1105 = vadd.xlane.f32.xlu0 %v1042
    %v1106 = vpop.xlane.xlu0 %1105
    %1107 = vadd.xlane.f32.xlu0 %v1044
    %v1108 = vpop.xlane.xlu0 %1107
    %1109 = vadd.xlane.f32.xlu0 %v1046
    %v1110 = vpop.xlane.xlu0 %1109
    %1111 = vadd.xlane.f32.xlu0 %v1048
    %v1112 = vpop.xlane.xlu0 %1111
    %1113 = vadd.xlane.f32.xlu0 %v1050
    %v1114 = vpop.xlane.xlu0 %1113
    %1115 = vadd.xlane.f32.xlu0 %v1052
    %v1116 = vpop.xlane.xlu0 %1115
    %1117 = vadd.xlane.f32.xlu0 %v1054
    %v1118 = vpop.xlane.xlu0 %1117
    %1119 = vadd.xlane.f32.xlu0 %v1056
    %v1120 = vpop.xlane.xlu0 %1119
    %1121 = vadd.xlane.f32.xlu0 %v1058
    %v1122 = vpop.xlane.xlu0 %1121
    %1123 = vadd.xlane.f32.xlu0 %v1060
    %v1124 = vpop.xlane.xlu0 %1123
    %1125 = vadd.xlane.f32.xlu0 %v1062
    %v1126 = vpop.xlane.xlu0 %1125
    %1127 = vadd.xlane.f32.xlu0 %v1064
    %v1128 = vpop.xlane.xlu0 %1127
    %1129 = vadd.xlane.f32.xlu0 %v1066
    %v1130 = vpop.xlane.xlu0 %1129
    %1131 = vadd.xlane.f32.xlu0 %v1068
    %v1132 = vpop.xlane.xlu0 %1131
    %1133 = vadd.xlane.f32.xlu0 %v1070
    %v1134 = vpop.xlane.xlu0 %1133
    %1135 = vadd.xlane.f32.xlu0 %v1072
    %v1136 = vpop.xlane.xlu0 %1135
    %1137 = vadd.xlane.f32.xlu0 %v1074
    %v1138 = vpop.xlane.xlu0 %1137
    %1139 = vadd.xlane.f32.xlu0 %v1076
    %v1140 = vpop.xlane.xlu0 %1139
    %1141 = vadd.xlane.f32.xlu0 %v1078
    %v1142 = vpop.xlane.xlu0 %1141
    %v1143 = vlog2.pop %v1080
    %v1144 = vmul.f32 %v1143, 0.6931472
    %v1145 = vlog2.pop %v1082
    %v1146 = vmul.f32 %v1145, 0.6931472
    %v1147 = vlog2.pop %v1084
    %v1148 = vmul.f32 %v1147, 0.6931472
    %v1149 = vlog2.pop %v1086
    %v1150 = vmul.f32 %v1149, 0.6931472
    %v1151 = vlog2.pop %v1088
    %v1152 = vmul.f32 %v1151, 0.6931472
    %v1153 = vlog2.pop %v1090
    %v1154 = vmul.f32 %v1153, 0.6931472
    %v1155 = vlog2.pop %v1092
    %v1156 = vmul.f32 %v1155, 0.6931472
    %v1157 = vlog2.pop %v1094
    %v1158 = vmul.f32 %v1157, 0.6931472
    %v1159 = vlog2.pop %v1096
    %v1160 = vmul.f32 %v1159, 0.6931472
    %v1161 = vlog2.pop %v1098
    %v1162 = vmul.f32 %v1161, 0.6931472
    %v1163 = vlog2.pop %v1100
    %v1164 = vmul.f32 %v1163, 0.6931472
    %v1165 = vlog2.pop %v1102
    %v1166 = vmul.f32 %v1165, 0.6931472
    %v1167 = vlog2.pop %v1104
    %v1168 = vmul.f32 %v1167, 0.6931472
    %v1169 = vlog2.pop %v1106
    %v1170 = vmul.f32 %v1169, 0.6931472
    %v1171 = vlog2.pop %v1108
    %v1172 = vmul.f32 %v1171, 0.6931472
    %v1173 = vlog2.pop %v1110
    %v1174 = vmul.f32 %v1173, 0.6931472
    %v1175 = vlog2.pop %v1112
    %v1176 = vmul.f32 %v1175, 0.6931472
    %v1177 = vlog2.pop %v1114
    %v1178 = vmul.f32 %v1177, 0.6931472
    %v1179 = vlog2.pop %v1116
    %v1180 = vmul.f32 %v1179, 0.6931472
    %v1181 = vlog2.pop %v1118
    %v1182 = vmul.f32 %v1181, 0.6931472
    %v1183 = vlog2.pop %v1120
    %v1184 = vmul.f32 %v1183, 0.6931472
    %v1185 = vlog2.pop %v1122
    %v1186 = vmul.f32 %v1185, 0.6931472
    %v1187 = vlog2.pop %v1124
    %v1188 = vmul.f32 %v1187, 0.6931472
    %v1189 = vlog2.pop %v1126
    %v1190 = vmul.f32 %v1189, 0.6931472
    %v1191 = vlog2.pop %v1128
    %v1192 = vmul.f32 %v1191, 0.6931472
    %v1193 = vlog2.pop %v1130
    %v1194 = vmul.f32 %v1193, 0.6931472
    %v1195 = vlog2.pop %v1132
    %v1196 = vmul.f32 %v1195, 0.6931472
    %v1197 = vlog2.pop %v1134
    %v1198 = vmul.f32 %v1197, 0.6931472
    %v1199 = vlog2.pop %v1136
    %v1200 = vmul.f32 %v1199, 0.6931472
    %v1201 = vlog2.pop %v1138
    %v1202 = vmul.f32 %v1201, 0.6931472
    %v1203 = vlog2.pop %v1140
    %v1204 = vmul.f32 %v1203, 0.6931472
    %v1205 = vlog2.pop %v1142
    %v1206 = vmul.f32 %v1205, 0.6931472
    %v1207 = vsub.f32 %v983, %v1144
    %v1208 = vsub.f32 %v984, %v1146
    %v1209 = vsub.f32 %v985, %v1148
    %v1210 = vsub.f32 %v986, %v1150
    %v1211 = vsub.f32 %v987, %v1152
    %v1212 = vsub.f32 %v988, %v1154
    %v1213 = vsub.f32 %v989, %v1156
    %v1214 = vsub.f32 %v990, %v1158
    %v1215 = vsub.f32 %v991, %v1160
    %v1216 = vsub.f32 %v992, %v1162
    %v1217 = vsub.f32 %v993, %v1164
    %v1218 = vsub.f32 %v994, %v1166
    %v1219 = vsub.f32 %v995, %v1168
    %v1220 = vsub.f32 %v996, %v1170
    %v1221 = vsub.f32 %v997, %v1172
    %v1222 = vsub.f32 %v998, %v1174
    %v1223 = vsub.f32 %v999, %v1176
    %v1224 = vsub.f32 %v1000, %v1178
    %v1225 = vsub.f32 %v1001, %v1180
    %v1226 = vsub.f32 %v1002, %v1182
    %v1227 = vsub.f32 %v1003, %v1184
    %v1228 = vsub.f32 %v1004, %v1186
    %v1229 = vsub.f32 %v1005, %v1188
    %v1230 = vsub.f32 %v1006, %v1190
    %v1231 = vsub.f32 %v1007, %v1192
    %v1232 = vsub.f32 %v1008, %v1194
    %v1233 = vsub.f32 %v1009, %v1196
    %v1234 = vsub.f32 %v1010, %v1198
    %v1235 = vsub.f32 %v1011, %v1200
    %v1236 = vsub.f32 %v1012, %v1202
    %v1237 = vsub.f32 %v1013, %v1204
    %v1238 = vsub.f32 %v1014, %v1206
    %1239 = vst [vmem:[%s4] sm:$0xff] %v1207
    %1240 = vst [vmem:[%s4 + $0x8] sm:$0xff] %v1208
    %1241 = vst [vmem:[%s4 + $0x10] sm:$0xff] %v1209
    %1242 = vst [vmem:[%s4 + $0x18] sm:$0xff] %v1210
    %1243 = vst [vmem:[%s4 + $0x20] sm:$0xff] %v1211
    %1244 = vst [vmem:[%s4 + $0x28] sm:$0xff] %v1212
    %1245 = vst [vmem:[%s4 + $0x30] sm:$0xff] %v1213
    %1246 = vst [vmem:[%s4 + $0x38] sm:$0xff] %v1214
    %1247 = vst [vmem:[%s4 + $0x40] sm:$0xff] %v1215
    %1248 = vst [vmem:[%s4 + $0x48] sm:$0xff] %v1216
    %1249 = vst [vmem:[%s4 + $0x50] sm:$0xff] %v1217
    %1250 = vst [vmem:[%s4 + $0x58] sm:$0xff] %v1218
    %1251 = vst [vmem:[%s4 + $0x60] sm:$0xff] %v1219
    %1252 = vst [vmem:[%s4 + $0x68] sm:$0xff] %v1220
    %1253 = vst [vmem:[%s4 + $0x70] sm:$0xff] %v1221
    %1254 = vst [vmem:[%s4 + $0x78] sm:$0xff] %v1222
    %1255 = vst [vmem:[%s4 + $0x80] sm:$0xff] %v1223
    %1256 = vst [vmem:[%s4 + $0x88] sm:$0xff] %v1224
    %1257 = vst [vmem:[%s4 + $0x90] sm:$0xff] %v1225
    %1258 = vst [vmem:[%s4 + $0x98] sm:$0xff] %v1226
    %1259 = vst [vmem:[%s4 + $0xa0] sm:$0xff] %v1227
    %1260 = vst [vmem:[%s4 + $0xa8] sm:$0xff] %v1228
    %1261 = vst [vmem:[%s4 + $0xb0] sm:$0xff] %v1229
    %1262 = vst [vmem:[%s4 + $0xb8] sm:$0xff] %v1230
    %1263 = vst [vmem:[%s4 + $0xc0] sm:$0xff] %v1231
    %1264 = vst [vmem:[%s4 + $0xc8] sm:$0xff] %v1232
    %1265 = vst [vmem:[%s4 + $0xd0] sm:$0xff] %v1233
    %1266 = vst [vmem:[%s4 + $0xd8] sm:$0xff] %v1234
    %1267 = vst [vmem:[%s4 + $0xe0] sm:$0xff] %v1235
    %1268 = vst [vmem:[%s4 + $0xe8] sm:$0xff] %v1236
    %1269 = vst [vmem:[%s4 + $0xf0] sm:$0xff] %v1237
    %1270 = vst [vmem:[%s4 + $0xf8] sm:$0xff] %v1238
  $region25: #{lightgcn_forward.3} parent=0 // pred_fallthru
    _
  // Predicated region
  $region26: #{lightgcn_forward.3} parent=0 // pred_check
    _
  $region27: #{lightgcn_forward.3} parent=0 // pred_check_branch
    %1272 = sbr.rel (0) target = $region29
  $region28: #{lightgcn_forward.3} parent=0 // pred_region
    _
  $region29: #{lightgcn_forward.3} parent=0 // pred_fallthru
    _
  // Predicated region
  $region30: #{lightgcn_forward.3} parent=0 // pred_check
    _
  $region31: #{lightgcn_forward.3} parent=0 // pred_check_branch
    %1274 = sbr.rel (0) target = $region33
  $region32: #{lightgcn_forward.3} parent=0 // pred_region
    _
  $region33: #{lightgcn_forward.3} parent=0 // pred_fallthru
    _

</llo_original>
